<compile_context>
chip_gen: v7x
topology: tpu7x:2x2x1
jax: 0.10.0
libtpu: 0.0.40
codegen_flags: <defaults>
</compile_context>

<pallas_src>
import jax
import jax.numpy as jnp
from jax.experimental import pallas as pl
from jax.experimental.pallas import tpu as pltpu  # noqa: F401  (kept for future tiling/params)

EPS = 1e-5  # torch.nn.LayerNorm default


def _layernorm(x, g, b):
    # One-pass mean / E[x^2]: both XLU cross-lane reductions can issue back-to-back
    # (var = E[x^2] - mean^2) instead of the second reduce waiting on (x - mu).
    mu = jnp.mean(x, axis=-1, keepdims=True)
    ms = jnp.mean(x * x, axis=-1, keepdims=True)
    var = ms - mu * mu
    return (x - mu) * jax.lax.rsqrt(var + EPS) * g + b


# ------------------------------ fused Pallas kernel -------------------------

def fused_encode_kernel(x_ref, wmat_ref, vecs_ref, o_ref):
    # x_ref:   (B, L, D) activation (contiguous view of the flat (B, L*D) input)
    # wmat_ref:(n_layers, D, 4*D) = [Wq | Wk | Wv | Wo] per layer (x @ W orientation)
    # vecs_ref:(L + 6*n_layers, D): rows [0:L) = PE table; per layer 6 rows =
    #          [w1, w2, ln1_gamma, ln1_beta, ln2_gamma, ln2_beta]
    # o_ref:   (B, L*D) lane-dense output
    B, L, D = x_ref.shape
    n_layers = wmat_ref.shape[0]
    BL = B * L

    pe = vecs_ref[0:L, :]                                  # (L, D) sinusoidal table
    x3 = x_ref[...] + pe[None, :, :]                       # positional-encoding add
    x2 = x3.reshape(BL, D)                                 # leading-dim merge only (no relayout)

    for layer in range(n_layers):                          # statically unrolled; weights stay in VMEM
        wm = wmat_ref[layer]                               # (D, 4*D): one dense 128-lane tile
        base = L + 6 * layer
        w1 = vecs_ref[base + 0:base + 1, :]                # (1, D) torch fc1 weight row (F == 1)
        w2 = vecs_ref[base + 1:base + 2, :]                # (1, D) torch fc2 weight column
        g1 = vecs_ref[base + 2:base + 3, :]
        b1 = vecs_ref[base + 3:base + 4, :]
        g2 = vecs_ref[base + 4:base + 5, :]
        b2 = vecs_ref[base + 5:base + 6, :]

        # ---- self-attention (Encode_layer hardcodes n_heads == 1) ----
        # Single (BL, D) @ (D, 4D) MXU matmul; the x@Wo columns [3D:4D) are unused
        # filler that costs nothing extra on a >=128-wide MXU, and the q/k/v slices
        # of the result are needed anyway.
        proj = jnp.dot(x2, wm, preferred_element_type=jnp.float32)    # (BL, 4D)
        q3 = proj[:, 0 * D:1 * D].reshape(B, L, D)
        k3 = proj[:, 1 * D:2 * D].reshape(B, L, D)
        v3 = proj[:, 2 * D:3 * D].reshape(B, L, D)

        # score = q @ k^T / sqrt(q.size(1)); reference q is (B, n_heads, L, D) so
        # q.size(1) == n_heads == 1 -> scale is exactly 1.0 (multiply skipped).
        s = jnp.einsum('bld,bmd->blm', q3, k3,
                       preferred_element_type=jnp.float32)            # (B, L, L)
        s = s - jnp.max(s, axis=-1, keepdims=True)
        p = jnp.exp(s)
        p = p / jnp.sum(p, axis=-1, keepdims=True)                     # exact softmax divide

        ctx = jnp.einsum('blm,bmd->bld', p, v3,
                         preferred_element_type=jnp.float32)           # (B, L, D)
        attn = jnp.dot(ctx.reshape(BL, D), wm[:, 3 * D:4 * D],
                       preferred_element_type=jnp.float32)             # (BL, D) Wo projection
        y = _layernorm(attn + x2, g1, b1)                              # add + LayerNorm

        # ---- feedforward Linear(D->1, no bias) -> ReLU -> Linear(1->D, no bias) ----
        # F == 1 rank-1 bottleneck on the VPU: row-reduce + broadcast outer product.
        h = jnp.maximum(jnp.sum(y * w1, axis=-1, keepdims=True), 0.0)  # (BL, 1)
        ff = h * w2                                                    # (BL, D)
        x2 = _layernorm(ff + y, g2, b2)                                # add + LayerNorm

    # Lane-dense store: assemble (B, L*D) (last dim 256 = 2x128 lanes) via static
    # minor-dim concatenation (avoids masked vst.msk on a 32-wide last dim and a
    # riskier minor-dim-changing reshape).
    y3 = x2.reshape(B, L, D)
    o_ref[...] = jnp.concatenate([y3[:, l, :] for l in range(L)], axis=-1)


# ------------------------------ glue (JAX) ----------------------------------

def sinusoidal_pe(L, D):
    assert D % 2 == 0, "sinusoidal PE assumes an even embedding dimension"
    pos = jnp.arange(L, dtype=jnp.float32)[:, None]                        # (L, 1)
    buff = jnp.power(1.0 / 10000.0,
                     2.0 * jnp.arange(0, D // 2, dtype=jnp.float32) / D)   # (D//2,)
    pe = jnp.zeros((L, D), jnp.float32)
    pe = pe.at[:, 0::2].set(jnp.sin(pos * buff))
    pe = pe.at[:, 1::2].set(jnp.cos(pos * buff))
    return pe


def init_encode_params(key, embedding_dim, encode_length, n_layers):
    """Pack all parameters (+ PE table) into two pre-concatenated f32 slabs so the
    pallas_call takes 3 operands instead of 10+ (per-operand DMA/window setup is the
    dominant fixed cost at this problem size).

    Specialized to Encode_layer's hardcoded n_heads=1 and feature_dimension=1.
    """
    D, L = embedding_dim, encode_length
    mats, vec_rows = [], [sinusoidal_pe(L, D)]
    for i in range(n_layers):
        ks = jax.random.split(jax.random.fold_in(key, i), 6)
        wq = 0.1 * jax.random.normal(ks[0], (D, D), jnp.float32)   # torch (D,D).T
        wk = 0.1 * jax.random.normal(ks[1], (D, D), jnp.float32)
        wv = 0.1 * jax.random.normal(ks[2], (D, D), jnp.float32)
        wo = 0.1 * jax.random.normal(ks[3], (D, D), jnp.float32)
        mats.append(jnp.concatenate([wq, wk, wv, wo], axis=1))     # (D, 4*D)
        w1 = 0.1 * jax.random.normal(ks[4], (1, D), jnp.float32)   # torch fc1 weight (1, D)
        w2 = 0.1 * jax.random.normal(ks[5], (1, D), jnp.float32)   # torch fc2 weight (D, 1).T
        g1 = jnp.ones((1, D), jnp.float32)
        b1 = jnp.zeros((1, D), jnp.float32)
        g2 = jnp.ones((1, D), jnp.float32)
        b2 = jnp.zeros((1, D), jnp.float32)
        vec_rows.append(jnp.concatenate([w1, w2, g1, b1, g2, b2], axis=0))  # (6, D)
    return dict(wmat=jnp.stack(mats, axis=0),                      # (n_layers, D, 4*D)
                vecs=jnp.concatenate(vec_rows, axis=0))            # (L + 6*n_layers, D)


def encode_forward(encode_inputs, params, *, encode_length, embedding_dim):
    """encode_inputs: (B, encode_length * embedding_dim) float32 (flat, as in Encode.forward)."""
    B = encode_inputs.shape[0]
    L, D = encode_length, embedding_dim
    n_layers = params["wmat"].shape[0]

    # Contiguous (B, L*D) -> (B, L, D) is a free metadata reshape outside the kernel;
    # doing the split in-kernel would require a lane->sublane relayout that costs more
    # than the masked-load savings at this size.
    x = encode_inputs.reshape(B, L, D).astype(jnp.float32)

    # Advisory cost hint so XLA schedules around the custom call when embedded in a
    # larger jitted graph.
    flops = n_layers * (
        2 * B * L * D * 4 * D       # fused qkv(+filler) projection
        + 2 * 2 * B * L * L * D     # score + ctx matmuls
        + 2 * B * L * D * D         # Wo projection
        + 6 * B * L * D)            # FF + residual adds (approx)
    transcendentals = n_layers * (B * L * L + 2 * B * L)   # softmax exp + 2 LN rsqrt
    bytes_accessed = 4 * (2 * B * L * D + params["wmat"].size + params["vecs"].size)

    out_flat = pl.pallas_call(
        fused_encode_kernel,
        out_shape=jax.ShapeDtypeStruct((B, L * D), jnp.float32),
        cost_estimate=pl.CostEstimate(flops=int(flops),
                                      transcendentals=int(transcendentals),
                                      bytes_accessed=int(bytes_accessed)),
        # No grid: single invocation on one TensorCore, everything resident in VMEM
        # (<64 KiB total) — well under budget on v5e/v6e (128 MiB) and v7x (64 MiB).
        # If B or L grows, add a leading batch grid axis with
        # dimension_semantics=("parallel",) to use v7x's second TensorCore.
    )(x, params["wmat"], params["vecs"])
    return out_flat.reshape(B, L, D)


# ---------------------------------- main -------------------------------------

if __name__ == "__main__":
    embedding_dimension = 32
    encode_length = 8
    n_layers = 2
    batch = 2

    key = jax.random.PRNGKey(0)
    k_in, k_par = jax.random.split(key)

    # Encode.forward expects a flat (batch, encode_length * embedding_dim) input
    encode_inputs = jax.random.normal(
        k_in, (batch, encode_length * embedding_dimension), dtype=jnp.float32)

    params = init_encode_params(k_par, embedding_dimension, encode_length, n_layers)

    out = encode_forward(encode_inputs, params,
                         encode_length=encode_length,
                         embedding_dim=embedding_dimension)
    out = jax.block_until_ready(out)

    assert out.shape == (batch, encode_length, embedding_dimension)
    assert bool(jnp.all(jnp.isfinite(out)))
    print("KERNEL_OK")
</pallas_src>

<mosaic_0001>
module attributes {stable_mosaic.version = 11 : i64} {
  func.func @fused_encode_kernel(%arg0: memref<2x8x32xf32, #tpu.memory_space<vmem>>, %arg1: memref<2x32x128xf32, #tpu.memory_space<vmem>>, %arg2: memref<20x32xf32, #tpu.memory_space<vmem>>, %arg3: memref<2x256xf32, #tpu.memory_space<vmem>>) attributes {dimension_semantics = [], scalar_prefetch = 0 : i64, scratch_operands = 0 : i64, tpu.core_type = #tpu.core_type<tc>} {
    %c0 = arith.constant 0 : index
    %c0_0 = arith.constant 0 : index
    %0 = vector.load %arg2[%c0, %c0_0] : memref<20x32xf32, #tpu.memory_space<vmem>>, vector<8x32xf32>
    %c0_1 = arith.constant 0 : index
    %c0_2 = arith.constant 0 : index
    %c0_3 = arith.constant 0 : index
    %1 = vector.load %arg0[%c0_1, %c0_2, %c0_3] : memref<2x8x32xf32, #tpu.memory_space<vmem>>, vector<2x8x32xf32>
    %2 = vector.shape_cast %0 : vector<8x32xf32> to vector<1x8x32xf32>
    %3 = vector.broadcast %2 : vector<1x8x32xf32> to vector<2x8x32xf32>
    %4 = arith.addf %1, %3 : vector<2x8x32xf32>
    %5 = vector.shape_cast %4 : vector<2x8x32xf32> to vector<16x32xf32>
    %c0_4 = arith.constant 0 : index
    %c0_5 = arith.constant 0 : index
    %c0_6 = arith.constant 0 : index
    %6 = vector.load %arg1[%c0_4, %c0_5, %c0_6] : memref<2x32x128xf32, #tpu.memory_space<vmem>>, vector<1x32x128xf32>
    %7 = vector.shape_cast %6 : vector<1x32x128xf32> to vector<32x128xf32>
    %c8 = arith.constant 8 : index
    %c0_7 = arith.constant 0 : index
    %8 = vector.load %arg2[%c8, %c0_7] : memref<20x32xf32, #tpu.memory_space<vmem>>, vector<1x32xf32>
    %c9 = arith.constant 9 : index
    %c0_8 = arith.constant 0 : index
    %9 = vector.load %arg2[%c9, %c0_8] : memref<20x32xf32, #tpu.memory_space<vmem>>, vector<1x32xf32>
    %c10 = arith.constant 10 : index
    %c0_9 = arith.constant 0 : index
    %10 = vector.load %arg2[%c10, %c0_9] : memref<20x32xf32, #tpu.memory_space<vmem>>, vector<1x32xf32>
    %c11 = arith.constant 11 : index
    %c0_10 = arith.constant 0 : index
    %11 = vector.load %arg2[%c11, %c0_10] : memref<20x32xf32, #tpu.memory_space<vmem>>, vector<1x32xf32>
    %c12 = arith.constant 12 : index
    %c0_11 = arith.constant 0 : index
    %12 = vector.load %arg2[%c12, %c0_11] : memref<20x32xf32, #tpu.memory_space<vmem>>, vector<1x32xf32>
    %c13 = arith.constant 13 : index
    %c0_12 = arith.constant 0 : index
    %13 = vector.load %arg2[%c13, %c0_12] : memref<20x32xf32, #tpu.memory_space<vmem>>, vector<1x32xf32>
    %cst = arith.constant dense<0.000000e+00> : vector<16x128xf32>
    %14 = tpu.matmul %5, %7, %cst {dimension_numbers = #tpu.dot_dimension_numbers<[1], [0], [0], [1], [0, 0, 1, 1], [], []>} : vector<16x32xf32>, vector<32x128xf32>, vector<16x128xf32> -> vector<16x128xf32>
    %15 = vector.extract_strided_slice %14 {offsets = [0, 0], sizes = [16, 32], strides = [1, 1]} : vector<16x128xf32> to vector<16x32xf32>
    %16 = vector.shape_cast %15 : vector<16x32xf32> to vector<2x8x32xf32>
    %17 = vector.extract_strided_slice %14 {offsets = [0, 32], sizes = [16, 32], strides = [1, 1]} : vector<16x128xf32> to vector<16x32xf32>
    %18 = vector.shape_cast %17 : vector<16x32xf32> to vector<2x8x32xf32>
    %19 = vector.extract_strided_slice %14 {offsets = [0, 64], sizes = [16, 32], strides = [1, 1]} : vector<16x128xf32> to vector<16x32xf32>
    %20 = vector.shape_cast %19 : vector<16x32xf32> to vector<2x8x32xf32>
    "tpu.trace_start"() <{level = 10 : i32, message = "bld,bmd->blm"}> : () -> ()
    %cst_13 = arith.constant dense<0.000000e+00> : vector<2x8x8xf32>
    %21 = tpu.matmul %16, %18, %cst_13 {dimension_numbers = #tpu.dot_dimension_numbers<[2], [2], [1], [1], [0, 0, 0, 1, 1, 1], [0], [0]>} : vector<2x8x32xf32>, vector<2x8x32xf32>, vector<2x8x8xf32> -> vector<2x8x8xf32>
    "tpu.trace_stop"() : () -> ()
    %cst_14 = arith.constant dense<0xFF800000> : vector<2x8xf32>
    %22 = vector.multi_reduction <maximumf>, %21, %cst_14 [2] : vector<2x8x8xf32> to vector<2x8xf32>
    %23 = vector.shape_cast %22 : vector<2x8xf32> to vector<2x8x1xf32>
    %24 = vector.broadcast %23 : vector<2x8x1xf32> to vector<2x8x8xf32>
    %25 = arith.subf %21, %24 : vector<2x8x8xf32>
    %26 = math.exp %25 : vector<2x8x8xf32>
    %cst_15 = arith.constant dense<0.000000e+00> : vector<2x8xf32>
    %27 = vector.multi_reduction <add>, %26, %cst_15 [2] : vector<2x8x8xf32> to vector<2x8xf32>
    %28 = vector.shape_cast %27 : vector<2x8xf32> to vector<2x8x1xf32>
    %29 = vector.broadcast %28 : vector<2x8x1xf32> to vector<2x8x8xf32>
    %30 = arith.divf %26, %29 : vector<2x8x8xf32>
    "tpu.trace_start"() <{level = 10 : i32, message = "blm,bmd->bld"}> : () -> ()
    %cst_16 = arith.constant dense<0.000000e+00> : vector<2x8x32xf32>
    %31 = tpu.matmul %30, %20, %cst_16 {dimension_numbers = #tpu.dot_dimension_numbers<[2], [1], [1], [2], [0, 0, 0, 1, 1, 2], [0], [0]>} : vector<2x8x8xf32>, vector<2x8x32xf32>, vector<2x8x32xf32> -> vector<2x8x32xf32>
    "tpu.trace_stop"() : () -> ()
    %32 = vector.shape_cast %31 : vector<2x8x32xf32> to vector<16x32xf32>
    %33 = vector.extract_strided_slice %7 {offsets = [0, 96], sizes = [32, 32], strides = [1, 1]} : vector<32x128xf32> to vector<32x32xf32>
    %cst_17 = arith.constant dense<0.000000e+00> : vector<16x32xf32>
    %34 = tpu.matmul %32, %33, %cst_17 {dimension_numbers = #tpu.dot_dimension_numbers<[1], [0], [0], [1], [0, 0, 1, 1], [], []>} : vector<16x32xf32>, vector<32x32xf32>, vector<16x32xf32> -> vector<16x32xf32>
    %35 = arith.addf %34, %5 : vector<16x32xf32>
    %cst_18 = arith.constant dense<0.000000e+00> : vector<16xf32>
    %36 = vector.multi_reduction <add>, %35, %cst_18 [1] : vector<16x32xf32> to vector<16xf32>
    %37 = vector.shape_cast %36 : vector<16xf32> to vector<16x1xf32>
    %cst_19 = arith.constant 3.200000e+01 : f32
    %38 = vector.broadcast %cst_19 : f32 to vector<16x1xf32>
    %39 = arith.divf %37, %38 : vector<16x1xf32>
    %40 = arith.mulf %35, %35 : vector<16x32xf32>
    %cst_20 = arith.constant dense<0.000000e+00> : vector<16xf32>
    %41 = vector.multi_reduction <add>, %40, %cst_20 [1] : vector<16x32xf32> to vector<16xf32>
    %42 = vector.shape_cast %41 : vector<16xf32> to vector<16x1xf32>
    %cst_21 = arith.constant 3.200000e+01 : f32
    %43 = vector.broadcast %cst_21 : f32 to vector<16x1xf32>
    %44 = arith.divf %42, %43 : vector<16x1xf32>
    %45 = arith.mulf %39, %39 : vector<16x1xf32>
    %46 = arith.subf %44, %45 : vector<16x1xf32>
    %47 = vector.broadcast %39 : vector<16x1xf32> to vector<16x32xf32>
    %48 = arith.subf %35, %47 : vector<16x32xf32>
    %cst_22 = arith.constant 9.99999974E-6 : f32
    %49 = vector.broadcast %cst_22 : f32 to vector<16x1xf32>
    %50 = arith.addf %46, %49 : vector<16x1xf32>
    %51 = math.rsqrt %50 : vector<16x1xf32>
    %52 = vector.broadcast %51 : vector<16x1xf32> to vector<16x32xf32>
    %53 = arith.mulf %48, %52 : vector<16x32xf32>
    %54 = vector.broadcast %10 : vector<1x32xf32> to vector<16x32xf32>
    %55 = arith.mulf %53, %54 : vector<16x32xf32>
    %56 = vector.broadcast %11 : vector<1x32xf32> to vector<16x32xf32>
    %57 = arith.addf %55, %56 : vector<16x32xf32>
    %58 = vector.broadcast %8 : vector<1x32xf32> to vector<16x32xf32>
    %59 = arith.mulf %57, %58 : vector<16x32xf32>
    %cst_23 = arith.constant dense<0.000000e+00> : vector<16xf32>
    %60 = vector.multi_reduction <add>, %59, %cst_23 [1] : vector<16x32xf32> to vector<16xf32>
    %61 = vector.shape_cast %60 : vector<16xf32> to vector<16x1xf32>
    %cst_24 = arith.constant 0.000000e+00 : f32
    %62 = vector.broadcast %cst_24 : f32 to vector<16x1xf32>
    %63 = arith.maximumf %61, %62 : vector<16x1xf32>
    %64 = vector.broadcast %63 : vector<16x1xf32> to vector<16x32xf32>
    %65 = vector.broadcast %9 : vector<1x32xf32> to vector<16x32xf32>
    %66 = arith.mulf %64, %65 : vector<16x32xf32>
    %67 = arith.addf %66, %57 : vector<16x32xf32>
    %cst_25 = arith.constant dense<0.000000e+00> : vector<16xf32>
    %68 = vector.multi_reduction <add>, %67, %cst_25 [1] : vector<16x32xf32> to vector<16xf32>
    %69 = vector.shape_cast %68 : vector<16xf32> to vector<16x1xf32>
    %cst_26 = arith.constant 3.200000e+01 : f32
    %70 = vector.broadcast %cst_26 : f32 to vector<16x1xf32>
    %71 = arith.divf %69, %70 : vector<16x1xf32>
    %72 = arith.mulf %67, %67 : vector<16x32xf32>
    %cst_27 = arith.constant dense<0.000000e+00> : vector<16xf32>
    %73 = vector.multi_reduction <add>, %72, %cst_27 [1] : vector<16x32xf32> to vector<16xf32>
    %74 = vector.shape_cast %73 : vector<16xf32> to vector<16x1xf32>
    %cst_28 = arith.constant 3.200000e+01 : f32
    %75 = vector.broadcast %cst_28 : f32 to vector<16x1xf32>
    %76 = arith.divf %74, %75 : vector<16x1xf32>
    %77 = arith.mulf %71, %71 : vector<16x1xf32>
    %78 = arith.subf %76, %77 : vector<16x1xf32>
    %79 = vector.broadcast %71 : vector<16x1xf32> to vector<16x32xf32>
    %80 = arith.subf %67, %79 : vector<16x32xf32>
    %cst_29 = arith.constant 9.99999974E-6 : f32
    %81 = vector.broadcast %cst_29 : f32 to vector<16x1xf32>
    %82 = arith.addf %78, %81 : vector<16x1xf32>
    %83 = math.rsqrt %82 : vector<16x1xf32>
    %84 = vector.broadcast %83 : vector<16x1xf32> to vector<16x32xf32>
    %85 = arith.mulf %80, %84 : vector<16x32xf32>
    %86 = vector.broadcast %12 : vector<1x32xf32> to vector<16x32xf32>
    %87 = arith.mulf %85, %86 : vector<16x32xf32>
    %88 = vector.broadcast %13 : vector<1x32xf32> to vector<16x32xf32>
    %89 = arith.addf %87, %88 : vector<16x32xf32>
    %c1 = arith.constant 1 : index
    %c0_30 = arith.constant 0 : index
    %c0_31 = arith.constant 0 : index
    %90 = vector.load %arg1[%c1, %c0_30, %c0_31] : memref<2x32x128xf32, #tpu.memory_space<vmem>>, vector<1x32x128xf32>
    %91 = vector.shape_cast %90 : vector<1x32x128xf32> to vector<32x128xf32>
    %c14 = arith.constant 14 : index
    %c0_32 = arith.constant 0 : index
    %92 = vector.load %arg2[%c14, %c0_32] : memref<20x32xf32, #tpu.memory_space<vmem>>, vector<1x32xf32>
    %c15 = arith.constant 15 : index
    %c0_33 = arith.constant 0 : index
    %93 = vector.load %arg2[%c15, %c0_33] : memref<20x32xf32, #tpu.memory_space<vmem>>, vector<1x32xf32>
    %c16 = arith.constant 16 : index
    %c0_34 = arith.constant 0 : index
    %94 = vector.load %arg2[%c16, %c0_34] : memref<20x32xf32, #tpu.memory_space<vmem>>, vector<1x32xf32>
    %c17 = arith.constant 17 : index
    %c0_35 = arith.constant 0 : index
    %95 = vector.load %arg2[%c17, %c0_35] : memref<20x32xf32, #tpu.memory_space<vmem>>, vector<1x32xf32>
    %c18 = arith.constant 18 : index
    %c0_36 = arith.constant 0 : index
    %96 = vector.load %arg2[%c18, %c0_36] : memref<20x32xf32, #tpu.memory_space<vmem>>, vector<1x32xf32>
    %c19 = arith.constant 19 : index
    %c0_37 = arith.constant 0 : index
    %97 = vector.load %arg2[%c19, %c0_37] : memref<20x32xf32, #tpu.memory_space<vmem>>, vector<1x32xf32>
    %cst_38 = arith.constant dense<0.000000e+00> : vector<16x128xf32>
    %98 = tpu.matmul %89, %91, %cst_38 {dimension_numbers = #tpu.dot_dimension_numbers<[1], [0], [0], [1], [0, 0, 1, 1], [], []>} : vector<16x32xf32>, vector<32x128xf32>, vector<16x128xf32> -> vector<16x128xf32>
    %99 = vector.extract_strided_slice %98 {offsets = [0, 0], sizes = [16, 32], strides = [1, 1]} : vector<16x128xf32> to vector<16x32xf32>
    %100 = vector.shape_cast %99 : vector<16x32xf32> to vector<2x8x32xf32>
    %101 = vector.extract_strided_slice %98 {offsets = [0, 32], sizes = [16, 32], strides = [1, 1]} : vector<16x128xf32> to vector<16x32xf32>
    %102 = vector.shape_cast %101 : vector<16x32xf32> to vector<2x8x32xf32>
    %103 = vector.extract_strided_slice %98 {offsets = [0, 64], sizes = [16, 32], strides = [1, 1]} : vector<16x128xf32> to vector<16x32xf32>
    %104 = vector.shape_cast %103 : vector<16x32xf32> to vector<2x8x32xf32>
    "tpu.trace_start"() <{level = 10 : i32, message = "bld,bmd->blm"}> : () -> ()
    %cst_39 = arith.constant dense<0.000000e+00> : vector<2x8x8xf32>
    %105 = tpu.matmul %100, %102, %cst_39 {dimension_numbers = #tpu.dot_dimension_numbers<[2], [2], [1], [1], [0, 0, 0, 1, 1, 1], [0], [0]>} : vector<2x8x32xf32>, vector<2x8x32xf32>, vector<2x8x8xf32> -> vector<2x8x8xf32>
    "tpu.trace_stop"() : () -> ()
    %cst_40 = arith.constant dense<0xFF800000> : vector<2x8xf32>
    %106 = vector.multi_reduction <maximumf>, %105, %cst_40 [2] : vector<2x8x8xf32> to vector<2x8xf32>
    %107 = vector.shape_cast %106 : vector<2x8xf32> to vector<2x8x1xf32>
    %108 = vector.broadcast %107 : vector<2x8x1xf32> to vector<2x8x8xf32>
    %109 = arith.subf %105, %108 : vector<2x8x8xf32>
    %110 = math.exp %109 : vector<2x8x8xf32>
    %cst_41 = arith.constant dense<0.000000e+00> : vector<2x8xf32>
    %111 = vector.multi_reduction <add>, %110, %cst_41 [2] : vector<2x8x8xf32> to vector<2x8xf32>
    %112 = vector.shape_cast %111 : vector<2x8xf32> to vector<2x8x1xf32>
    %113 = vector.broadcast %112 : vector<2x8x1xf32> to vector<2x8x8xf32>
    %114 = arith.divf %110, %113 : vector<2x8x8xf32>
    "tpu.trace_start"() <{level = 10 : i32, message = "blm,bmd->bld"}> : () -> ()
    %cst_42 = arith.constant dense<0.000000e+00> : vector<2x8x32xf32>
    %115 = tpu.matmul %114, %104, %cst_42 {dimension_numbers = #tpu.dot_dimension_numbers<[2], [1], [1], [2], [0, 0, 0, 1, 1, 2], [0], [0]>} : vector<2x8x8xf32>, vector<2x8x32xf32>, vector<2x8x32xf32> -> vector<2x8x32xf32>
    "tpu.trace_stop"() : () -> ()
    %116 = vector.shape_cast %115 : vector<2x8x32xf32> to vector<16x32xf32>
    %117 = vector.extract_strided_slice %91 {offsets = [0, 96], sizes = [32, 32], strides = [1, 1]} : vector<32x128xf32> to vector<32x32xf32>
    %cst_43 = arith.constant dense<0.000000e+00> : vector<16x32xf32>
    %118 = tpu.matmul %116, %117, %cst_43 {dimension_numbers = #tpu.dot_dimension_numbers<[1], [0], [0], [1], [0, 0, 1, 1], [], []>} : vector<16x32xf32>, vector<32x32xf32>, vector<16x32xf32> -> vector<16x32xf32>
    %119 = arith.addf %118, %89 : vector<16x32xf32>
    %cst_44 = arith.constant dense<0.000000e+00> : vector<16xf32>
    %120 = vector.multi_reduction <add>, %119, %cst_44 [1] : vector<16x32xf32> to vector<16xf32>
    %121 = vector.shape_cast %120 : vector<16xf32> to vector<16x1xf32>
    %cst_45 = arith.constant 3.200000e+01 : f32
    %122 = vector.broadcast %cst_45 : f32 to vector<16x1xf32>
    %123 = arith.divf %121, %122 : vector<16x1xf32>
    %124 = arith.mulf %119, %119 : vector<16x32xf32>
    %cst_46 = arith.constant dense<0.000000e+00> : vector<16xf32>
    %125 = vector.multi_reduction <add>, %124, %cst_46 [1] : vector<16x32xf32> to vector<16xf32>
    %126 = vector.shape_cast %125 : vector<16xf32> to vector<16x1xf32>
    %cst_47 = arith.constant 3.200000e+01 : f32
    %127 = vector.broadcast %cst_47 : f32 to vector<16x1xf32>
    %128 = arith.divf %126, %127 : vector<16x1xf32>
    %129 = arith.mulf %123, %123 : vector<16x1xf32>
    %130 = arith.subf %128, %129 : vector<16x1xf32>
    %131 = vector.broadcast %123 : vector<16x1xf32> to vector<16x32xf32>
    %132 = arith.subf %119, %131 : vector<16x32xf32>
    %cst_48 = arith.constant 9.99999974E-6 : f32
    %133 = vector.broadcast %cst_48 : f32 to vector<16x1xf32>
    %134 = arith.addf %130, %133 : vector<16x1xf32>
    %135 = math.rsqrt %134 : vector<16x1xf32>
    %136 = vector.broadcast %135 : vector<16x1xf32> to vector<16x32xf32>
    %137 = arith.mulf %132, %136 : vector<16x32xf32>
    %138 = vector.broadcast %94 : vector<1x32xf32> to vector<16x32xf32>
    %139 = arith.mulf %137, %138 : vector<16x32xf32>
    %140 = vector.broadcast %95 : vector<1x32xf32> to vector<16x32xf32>
    %141 = arith.addf %139, %140 : vector<16x32xf32>
    %142 = vector.broadcast %92 : vector<1x32xf32> to vector<16x32xf32>
    %143 = arith.mulf %141, %142 : vector<16x32xf32>
    %cst_49 = arith.constant dense<0.000000e+00> : vector<16xf32>
    %144 = vector.multi_reduction <add>, %143, %cst_49 [1] : vector<16x32xf32> to vector<16xf32>
    %145 = vector.shape_cast %144 : vector<16xf32> to vector<16x1xf32>
    %cst_50 = arith.constant 0.000000e+00 : f32
    %146 = vector.broadcast %cst_50 : f32 to vector<16x1xf32>
    %147 = arith.maximumf %145, %146 : vector<16x1xf32>
    %148 = vector.broadcast %147 : vector<16x1xf32> to vector<16x32xf32>
    %149 = vector.broadcast %93 : vector<1x32xf32> to vector<16x32xf32>
    %150 = arith.mulf %148, %149 : vector<16x32xf32>
    %151 = arith.addf %150, %141 : vector<16x32xf32>
    %cst_51 = arith.constant dense<0.000000e+00> : vector<16xf32>
    %152 = vector.multi_reduction <add>, %151, %cst_51 [1] : vector<16x32xf32> to vector<16xf32>
    %153 = vector.shape_cast %152 : vector<16xf32> to vector<16x1xf32>
    %cst_52 = arith.constant 3.200000e+01 : f32
    %154 = vector.broadcast %cst_52 : f32 to vector<16x1xf32>
    %155 = arith.divf %153, %154 : vector<16x1xf32>
    %156 = arith.mulf %151, %151 : vector<16x32xf32>
    %cst_53 = arith.constant dense<0.000000e+00> : vector<16xf32>
    %157 = vector.multi_reduction <add>, %156, %cst_53 [1] : vector<16x32xf32> to vector<16xf32>
    %158 = vector.shape_cast %157 : vector<16xf32> to vector<16x1xf32>
    %cst_54 = arith.constant 3.200000e+01 : f32
    %159 = vector.broadcast %cst_54 : f32 to vector<16x1xf32>
    %160 = arith.divf %158, %159 : vector<16x1xf32>
    %161 = arith.mulf %155, %155 : vector<16x1xf32>
    %162 = arith.subf %160, %161 : vector<16x1xf32>
    %163 = vector.broadcast %155 : vector<16x1xf32> to vector<16x32xf32>
    %164 = arith.subf %151, %163 : vector<16x32xf32>
    %cst_55 = arith.constant 9.99999974E-6 : f32
    %165 = vector.broadcast %cst_55 : f32 to vector<16x1xf32>
    %166 = arith.addf %162, %165 : vector<16x1xf32>
    %167 = math.rsqrt %166 : vector<16x1xf32>
    %168 = vector.broadcast %167 : vector<16x1xf32> to vector<16x32xf32>
    %169 = arith.mulf %164, %168 : vector<16x32xf32>
    %170 = vector.broadcast %96 : vector<1x32xf32> to vector<16x32xf32>
    %171 = arith.mulf %169, %170 : vector<16x32xf32>
    %172 = vector.broadcast %97 : vector<1x32xf32> to vector<16x32xf32>
    %173 = arith.addf %171, %172 : vector<16x32xf32>
    %174 = vector.shape_cast %173 : vector<16x32xf32> to vector<2x8x32xf32>
    %175 = vector.extract_strided_slice %174 {offsets = [0, 0, 0], sizes = [2, 1, 32], strides = [1, 1, 1]} : vector<2x8x32xf32> to vector<2x1x32xf32>
    %176 = vector.shape_cast %175 : vector<2x1x32xf32> to vector<2x32xf32>
    %177 = vector.extract_strided_slice %174 {offsets = [0, 1, 0], sizes = [2, 1, 32], strides = [1, 1, 1]} : vector<2x8x32xf32> to vector<2x1x32xf32>
    %178 = vector.shape_cast %177 : vector<2x1x32xf32> to vector<2x32xf32>
    %179 = vector.extract_strided_slice %174 {offsets = [0, 2, 0], sizes = [2, 1, 32], strides = [1, 1, 1]} : vector<2x8x32xf32> to vector<2x1x32xf32>
    %180 = vector.shape_cast %179 : vector<2x1x32xf32> to vector<2x32xf32>
    %181 = vector.extract_strided_slice %174 {offsets = [0, 3, 0], sizes = [2, 1, 32], strides = [1, 1, 1]} : vector<2x8x32xf32> to vector<2x1x32xf32>
    %182 = vector.shape_cast %181 : vector<2x1x32xf32> to vector<2x32xf32>
    %183 = vector.extract_strided_slice %174 {offsets = [0, 4, 0], sizes = [2, 1, 32], strides = [1, 1, 1]} : vector<2x8x32xf32> to vector<2x1x32xf32>
    %184 = vector.shape_cast %183 : vector<2x1x32xf32> to vector<2x32xf32>
    %185 = vector.extract_strided_slice %174 {offsets = [0, 5, 0], sizes = [2, 1, 32], strides = [1, 1, 1]} : vector<2x8x32xf32> to vector<2x1x32xf32>
    %186 = vector.shape_cast %185 : vector<2x1x32xf32> to vector<2x32xf32>
    %187 = vector.extract_strided_slice %174 {offsets = [0, 6, 0], sizes = [2, 1, 32], strides = [1, 1, 1]} : vector<2x8x32xf32> to vector<2x1x32xf32>
    %188 = vector.shape_cast %187 : vector<2x1x32xf32> to vector<2x32xf32>
    %189 = vector.extract_strided_slice %174 {offsets = [0, 7, 0], sizes = [2, 1, 32], strides = [1, 1, 1]} : vector<2x8x32xf32> to vector<2x1x32xf32>
    %190 = vector.shape_cast %189 : vector<2x1x32xf32> to vector<2x32xf32>
    %191 = tpu.concatenate %176, %178, %180, %182, %184, %186, %188, %190 in 1 : vector<2x32xf32>, vector<2x32xf32>, vector<2x32xf32>, vector<2x32xf32>, vector<2x32xf32>, vector<2x32xf32>, vector<2x32xf32>, vector<2x32xf32> -> vector<2x256xf32>
    %c0_56 = arith.constant 0 : index
    %c0_57 = arith.constant 0 : index
    %192 = vector.load %arg3[%c0_56, %c0_57] : memref<2x256xf32, #tpu.memory_space<vmem>>, vector<2x256xf32>
    tpu.vector_store %arg3[%c0_56, %c0_57], %191 {strides = array<i32>} : memref<2x256xf32, #tpu.memory_space<vmem>>, vector<2x256xf32>,
    return
  }
}

</mosaic_0001>

<llo_original>
// kernel: tpu_custom_call.1
$region0: #{tpu_custom_call.1}
  #allocation0 [shape = 'u32[]', space=smem, size = 0x4, offset = 0x4, fixed_abs, tag = 'smem constant byte address 0x4 - core index']
  #allocation1 [shape = 'u32[144,128]{1,0:T(1,128)}', space=vmem, size = 0x12000, scoped, tag = 'internal scratch']
  %s0 = inlined_call_operand.hbm [shape: f32[2,8,32], index: 0, kind: input, shape index: {}]
  %s1 = inlined_call_operand.hbm [shape: f32[2,32,128], index: 1, kind: input, shape index: {}]
  %s2 = inlined_call_operand.hbm [shape: f32[20,32], index: 2, kind: input, shape index: {}]
  %s3 = inlined_call_operand.hbm [shape: f32[2,256], index: 3, kind: output, shape index: {}]
  %s4 = sld [smem:[#allocation0]]
  $region34: #{tpu_custom_call.1} parent=0
    _
  %s6 = ssub.s32 1, %s4
  %s7 = scalar_select 0, %s6, %s4
  $region1: #{tpu_custom_call.1} parent=0
    #allocation2 [shape = 'u8[8192]{0}', space=vmem, size = 0x2000, scoped, tag = 'input window, operand 0, single buffered']
    #allocation3 [shape = 's32[1]{0}', space=sflag, size = 0x4, scoped, tag = 'scoped memory for tpu_custom_call.1']
    #allocation4 [shape = 's32[1]{0}', space=sflag, size = 0x4, scoped, tag = 'scoped memory for tpu_custom_call.1']
    #allocation5 [shape = 'u8[32768]{0}', space=vmem, size = 0x8000, scoped, tag = 'input window, operand 1, single buffered']
    #allocation6 [shape = 's32[1]{0}', space=sflag, size = 0x4, scoped, tag = 'scoped memory for tpu_custom_call.1']
    #allocation7 [shape = 'u8[12288]{0}', space=vmem, size = 0x3000, scoped, tag = 'input window, operand 2, single buffered']
    #allocation8 [shape = 'u8[2048]{0}', space=vmem, size = 0x800, scoped, tag = 'output window, operand 0, single buffered']
    %8 = vsyncpa [#allocation3], 0
    %9 = vsyncpa [#allocation6], 0
    %10 = vsyncpa [#allocation4], 0
    // Predicated region
    $region2: #{tpu_custom_call.1} parent=1 // pred_check
      _
    $region3: #{tpu_custom_call.1} parent=1 // pred_check_branch
      %12 = sbr.rel (0) target = $region5
    $region4: #{tpu_custom_call.1} parent=1 // pred_region
      %s14 = ssub.s32 256, 256
      %15 = vsyncadd [#allocation3], %s14
      %s16 = sshll.u32 [#allocation2], 4
      %s17 = int_to_ptr.vmem [resolvable:$true] %s16
      %22 = dma.hbm_to_vmem [thread:$0]  %s0, 256, %s17, [#allocation3], 128, 128, 8
    $region5: #{tpu_custom_call.1} parent=1 // pred_fallthru
      _
    // Predicated region
    $region6: #{tpu_custom_call.1} parent=1 // pred_check
      _
    $region7: #{tpu_custom_call.1} parent=1 // pred_check_branch
      %24 = sbr.rel (0) target = $region9
    $region8: #{tpu_custom_call.1} parent=1 // pred_region
      %s26 = ssub.s32 1024, 1024
      %27 = vsyncadd [#allocation6], %s26
      %s28 = sshll.u32 [#allocation5], 4
      %s29 = int_to_ptr.vmem [resolvable:$true] %s28
      %34 = dma.hbm_to_vmem [thread:$0]  %s1, 1024, %s29, [#allocation6], 128, 128, 8
    $region9: #{tpu_custom_call.1} parent=1 // pred_fallthru
      _
    // Predicated region
    $region10: #{tpu_custom_call.1} parent=1 // pred_check
      _
    $region11: #{tpu_custom_call.1} parent=1 // pred_check_branch
      %36 = sbr.rel (0) target = $region13
    $region12: #{tpu_custom_call.1} parent=1 // pred_region
      %s38 = ssub.s32 384, 384
      %39 = vsyncadd [#allocation6], %s38
      %s40 = sshll.u32 [#allocation7], 4
      %s41 = int_to_ptr.vmem [resolvable:$true] %s40
      %46 = dma.hbm_to_vmem [thread:$0]  %s2, 384, %s41, [#allocation6], 128, 128, 8
    $region13: #{tpu_custom_call.1} parent=1 // pred_fallthru
      _
    // Predicated region
    $region14: #{tpu_custom_call.1} parent=1 // pred_check
      _
    $region15: #{tpu_custom_call.1} parent=1 // pred_check_branch
      %48 = sbr.rel (0) target = $region17
    $region16: #{tpu_custom_call.1} parent=1 // pred_region
      %49 = dma.done [#allocation3], 256
    $region17: #{tpu_custom_call.1} parent=1 // pred_fallthru
      _
    // Predicated region
    $region18: #{tpu_custom_call.1} parent=1 // pred_check
      _
    $region19: #{tpu_custom_call.1} parent=1 // pred_check_branch
      %51 = sbr.rel (0) target = $region21
    $region20: #{tpu_custom_call.1} parent=1 // pred_region
      %52 = dma.done [#allocation6], 1024
    $region21: #{tpu_custom_call.1} parent=1 // pred_fallthru
      _
    // Predicated region
    $region22: #{tpu_custom_call.1} parent=1 // pred_check
      _
    $region23: #{tpu_custom_call.1} parent=1 // pred_check_branch
      %54 = sbr.rel (0) target = $region25
    $region24: #{tpu_custom_call.1} parent=1 // pred_region
      %55 = dma.done [#allocation6], 384
    $region25: #{tpu_custom_call.1} parent=1 // pred_fallthru
      _
    %v56 = vld [vmem:[#allocation7] sm:$0xff]
    %v57 = vld [vmem:[#allocation2] sm:$0xff]
    %v58 = vld [vmem:[#allocation2 + $0x8] sm:$0xff]
    %v59 = vadd.f32 %v57, %v56
    %v60 = vadd.f32 %v58, %v56
    %v61 = vld [vmem:[#allocation5] sm:$0xff]
    %v62 = vld [vmem:[#allocation5 + $0x8] sm:$0xff]
    %v63 = vld [vmem:[#allocation5 + $0x10] sm:$0xff]
    %v64 = vld [vmem:[#allocation5 + $0x18] sm:$0xff]
    %v65 = vld [vmem:[#allocation7 + $0x8] sm:$0x1]
    %v66 = vld [vmem:[#allocation7 + $0x9] sm:$0x1]
    %v67 = vld [vmem:[#allocation7 + $0xa] sm:$0x1]
    %v68 = vld [vmem:[#allocation7 + $0xb] sm:$0x1]
    %v69 = vld [vmem:[#allocation7 + $0xc] sm:$0x1]
    %v70 = vld [vmem:[#allocation7 + $0xd] sm:$0x1]
    %vm71 = vcmask 261120
    %v73 = vsel %vm71, %v59, 0
    %v76 = vsel %vm71, %v60, 0
    %78 = vmatprep.subr.mxu0 0.0
    %79 = vmatpush1.msra.mxu0 %v61
    %80 = vmatprep.subr.mxu0 0.0
    %81 = vmatpush1.msra.mxu0 %v62
    %82 = vmatprep.subr.mxu0 0.0
    %83 = vmatpush1.msra.mxu0 %v63
    %84 = vmatprep.subr.mxu0 0.0
    %85 = vmatpush1.msra.mxu0 %v64
    %86 = vmatprep.subr.mxu0 0.0
    %87 = vmatpush1.msra.mxu0 0.0
    %88 = vmatprep.subr.mxu0 0.0
    %89 = vmatpush1.msra.mxu0 0.0
    %90 = vmatprep.subr.mxu0 0.0
    %91 = vmatpush1.msra.mxu0 0.0
    %92 = vmatprep.subr.mxu0 0.0
    %93 = vmatpush1.msra.mxu0 0.0
    %94 = vmatprep.subr.mxu0 0.0
    %95 = vmatpush1.msra.mxu0 0.0
    %96 = vmatprep.subr.mxu0 0.0
    %97 = vmatpush1.msra.mxu0 0.0
    %98 = vmatprep.subr.mxu0 0.0
    %99 = vmatpush1.msra.mxu0 0.0
    %100 = vmatprep.subr.mxu0 0.0
    %101 = vmatpush1.msra.mxu0 0.0
    %102 = vmatprep.subr.mxu0 0.0
    %103 = vmatpush1.msra.mxu0 0.0
    %104 = vmatprep.subr.mxu0 0.0
    %105 = vmatpush1.msra.mxu0 0.0
    %106 = vmatprep.subr.mxu0 0.0
    %107 = vmatpush1.msra.mxu0 0.0
    %108 = vmatprep.subr.mxu0 0.0
    %109 = vmatpush1.msra.mxu0 0.0
    %110 = vmatprep.subr.mxu0 0.0
    %111 = vmatpush1.msra.mxu0 0.0
    %112 = vmatprep.subr.mxu0 0.0
    %113 = vmatpush1.msra.mxu0 0.0
    %114 = vmatprep.subr.mxu0 0.0
    %115 = vmatpush1.msra.mxu0 0.0
    %116 = vmatprep.subr.mxu0 0.0
    %117 = vmatpush1.msra.mxu0 0.0
    %118 = vmatprep.subr.mxu0 0.0
    %119 = vmatpush1.msra.mxu0 0.0
    %120 = vmatprep.subr.mxu0 0.0
    %121 = vmatpush1.msra.mxu0 0.0
    %122 = vmatprep.subr.mxu0 0.0
    %123 = vmatpush1.msra.mxu0 0.0
    %124 = vmatprep.subr.mxu0 0.0
    %125 = vmatpush1.msra.mxu0 0.0
    %126 = vmatprep.subr.mxu0 0.0
    %127 = vmatpush1.msra.mxu0 0.0
    %128 = vmatprep.subr.mxu0 0.0
    %129 = vmatpush1.msra.mxu0 0.0
    %130 = vmatprep.subr.mxu0 0.0
    %131 = vmatpush1.msra.mxu0 0.0
    %132 = vmatprep.subr.mxu0 0.0
    %133 = vmatpush1.msra.mxu0 0.0
    %134 = vmatprep.subr.mxu0 0.0
    %135 = vmatpush1.msra.mxu0 0.0
    %136 = vmatprep.subr.mxu0 0.0
    %137 = vmatpush1.msra.mxu0 0.0
    %138 = vmatprep.subr.mxu0 0.0
    %139 = vmatpush1.msra.mxu0 0.0
    %140 = vmatprep.subr.mxu0 0.0
    %141 = vmatpush1.msra.mxu0 0.0
    %142 = vmatprep.mubr.f32.mxu0 0.0
    %143 = vmatmul.mubr.f32.gmra.mrb[0].mxu0 %v73
    %v144 = vpop.f32.mrb[0].mxu0
    %v145 = vadd.f32 0.0, %v144
    %v146 = vpop.f32.mrb[0].mxu0
    %147 = vmatprep.mubr.f32.mxu0 0.0
    %148 = vmatmul.mubr.f32.gmra.mrb[0].mxu0 %v76
    %v149 = vpop.f32.mrb[0].mxu0
    %v150 = vadd.f32 0.0, %v149
    %v151 = vpop.f32.mrb[0].mxu0
    %152 = vdwg.mxu0
    %154 = vrot.lane.b32.xlu0 %v145, 96
    %v155 = vpop.permute.xlu0 %154
    %v156 = vsel %vm71, %v145, 0
    %v158 = vsel %vm71, %v155, 0
    %160 = vmatprep.subr.mxu0 0.0
    %161 = vmatpush1.xpose.msra.mxu0 %v158
    %162 = vmatprep.subr.mxu0 0.0
    %163 = vmatpush1.xpose.msra.mxu0 0.0
    %164 = vmatprep.subr.mxu0 0.0
    %165 = vmatpush1.xpose.msra.mxu0 0.0
    %166 = vmatprep.subr.mxu0 0.0
    %167 = vmatpush1.xpose.msra.mxu0 0.0
    %168 = vmatprep.subr.mxu0 0.0
    %169 = vmatpush1.xpose.msra.mxu0 0.0
    %170 = vmatprep.subr.mxu0 0.0
    %171 = vmatpush1.xpose.msra.mxu0 0.0
    %172 = vmatprep.subr.mxu0 0.0
    %173 = vmatpush1.xpose.msra.mxu0 0.0
    %174 = vmatprep.subr.mxu0 0.0
    %175 = vmatpush1.xpose.msra.mxu0 0.0
    %176 = vmatprep.subr.mxu0 0.0
    %177 = vmatpush1.xpose.msra.mxu0 0.0
    %178 = vmatprep.subr.mxu0 0.0
    %179 = vmatpush1.xpose.msra.mxu0 0.0
    %180 = vmatprep.subr.mxu0 0.0
    %181 = vmatpush1.xpose.msra.mxu0 0.0
    %182 = vmatprep.subr.mxu0 0.0
    %183 = vmatpush1.xpose.msra.mxu0 0.0
    %184 = vmatprep.subr.mxu0 0.0
    %185 = vmatpush1.xpose.msra.mxu0 0.0
    %186 = vmatprep.subr.mxu0 0.0
    %187 = vmatpush1.xpose.msra.mxu0 0.0
    %188 = vmatprep.subr.mxu0 0.0
    %189 = vmatpush1.xpose.msra.mxu0 0.0
    %190 = vmatprep.subr.mxu0 0.0
    %191 = vmatpush1.xpose.msra.mxu0 0.0
    %192 = vmatprep.subr.mxu0 0.0
    %193 = vmatpush1.xpose.msra.mxu0 0.0
    %194 = vmatprep.subr.mxu0 0.0
    %195 = vmatpush1.xpose.msra.mxu0 0.0
    %196 = vmatprep.subr.mxu0 0.0
    %197 = vmatpush1.xpose.msra.mxu0 0.0
    %198 = vmatprep.subr.mxu0 0.0
    %199 = vmatpush1.xpose.msra.mxu0 0.0
    %200 = vmatprep.subr.mxu0 0.0
    %201 = vmatpush1.xpose.msra.mxu0 0.0
    %202 = vmatprep.subr.mxu0 0.0
    %203 = vmatpush1.xpose.msra.mxu0 0.0
    %204 = vmatprep.subr.mxu0 0.0
    %205 = vmatpush1.xpose.msra.mxu0 0.0
    %206 = vmatprep.subr.mxu0 0.0
    %207 = vmatpush1.xpose.msra.mxu0 0.0
    %208 = vmatprep.subr.mxu0 0.0
    %209 = vmatpush1.xpose.msra.mxu0 0.0
    %210 = vmatprep.subr.mxu0 0.0
    %211 = vmatpush1.xpose.msra.mxu0 0.0
    %212 = vmatprep.subr.mxu0 0.0
    %213 = vmatpush1.xpose.msra.mxu0 0.0
    %214 = vmatprep.subr.mxu0 0.0
    %215 = vmatpush1.xpose.msra.mxu0 0.0
    %216 = vmatprep.subr.mxu0 0.0
    %217 = vmatpush1.xpose.msra.mxu0 0.0
    %218 = vmatprep.subr.mxu0 0.0
    %219 = vmatpush1.xpose.msra.mxu0 0.0
    %220 = vmatprep.subr.mxu0 0.0
    %221 = vmatpush1.xpose.msra.mxu0 0.0
    %222 = vmatprep.subr.mxu0 0.0
    %223 = vmatpush1.xpose.msra.mxu0 0.0
    %224 = vmatprep.mubr.f32.mxu0 0.0
    %225 = vmatmul.mubr.f32.gmra.mrb[0].mxu0 %v156
    %v226 = vpop.f32.mrb[0].mxu0
    %v227 = vadd.f32 0.0, %v226
    %v228 = vpop.f32.mrb[0].mxu0
    %229 = vdwg.mxu0
    %231 = vrot.lane.b32.xlu0 %v150, 96
    %v232 = vpop.permute.xlu0 %231
    %v233 = vsel %vm71, %v150, 0
    %v235 = vsel %vm71, %v232, 0
    %237 = vmatprep.subr.mxu0 0.0
    %238 = vmatpush1.xpose.msra.mxu0 %v235
    %239 = vmatprep.subr.mxu0 0.0
    %240 = vmatpush1.xpose.msra.mxu0 0.0
    %241 = vmatprep.subr.mxu0 0.0
    %242 = vmatpush1.xpose.msra.mxu0 0.0
    %243 = vmatprep.subr.mxu0 0.0
    %244 = vmatpush1.xpose.msra.mxu0 0.0
    %245 = vmatprep.subr.mxu0 0.0
    %246 = vmatpush1.xpose.msra.mxu0 0.0
    %247 = vmatprep.subr.mxu0 0.0
    %248 = vmatpush1.xpose.msra.mxu0 0.0
    %249 = vmatprep.subr.mxu0 0.0
    %250 = vmatpush1.xpose.msra.mxu0 0.0
    %251 = vmatprep.subr.mxu0 0.0
    %252 = vmatpush1.xpose.msra.mxu0 0.0
    %253 = vmatprep.subr.mxu0 0.0
    %254 = vmatpush1.xpose.msra.mxu0 0.0
    %255 = vmatprep.subr.mxu0 0.0
    %256 = vmatpush1.xpose.msra.mxu0 0.0
    %257 = vmatprep.subr.mxu0 0.0
    %258 = vmatpush1.xpose.msra.mxu0 0.0
    %259 = vmatprep.subr.mxu0 0.0
    %260 = vmatpush1.xpose.msra.mxu0 0.0
    %261 = vmatprep.subr.mxu0 0.0
    %262 = vmatpush1.xpose.msra.mxu0 0.0
    %263 = vmatprep.subr.mxu0 0.0
    %264 = vmatpush1.xpose.msra.mxu0 0.0
    %265 = vmatprep.subr.mxu0 0.0
    %266 = vmatpush1.xpose.msra.mxu0 0.0
    %267 = vmatprep.subr.mxu0 0.0
    %268 = vmatpush1.xpose.msra.mxu0 0.0
    %269 = vmatprep.subr.mxu0 0.0
    %270 = vmatpush1.xpose.msra.mxu0 0.0
    %271 = vmatprep.subr.mxu0 0.0
    %272 = vmatpush1.xpose.msra.mxu0 0.0
    %273 = vmatprep.subr.mxu0 0.0
    %274 = vmatpush1.xpose.msra.mxu0 0.0
    %275 = vmatprep.subr.mxu0 0.0
    %276 = vmatpush1.xpose.msra.mxu0 0.0
    %277 = vmatprep.subr.mxu0 0.0
    %278 = vmatpush1.xpose.msra.mxu0 0.0
    %279 = vmatprep.subr.mxu0 0.0
    %280 = vmatpush1.xpose.msra.mxu0 0.0
    %281 = vmatprep.subr.mxu0 0.0
    %282 = vmatpush1.xpose.msra.mxu0 0.0
    %283 = vmatprep.subr.mxu0 0.0
    %284 = vmatpush1.xpose.msra.mxu0 0.0
    %285 = vmatprep.subr.mxu0 0.0
    %286 = vmatpush1.xpose.msra.mxu0 0.0
    %287 = vmatprep.subr.mxu0 0.0
    %288 = vmatpush1.xpose.msra.mxu0 0.0
    %289 = vmatprep.subr.mxu0 0.0
    %290 = vmatpush1.xpose.msra.mxu0 0.0
    %291 = vmatprep.subr.mxu0 0.0
    %292 = vmatpush1.xpose.msra.mxu0 0.0
    %293 = vmatprep.subr.mxu0 0.0
    %294 = vmatpush1.xpose.msra.mxu0 0.0
    %295 = vmatprep.subr.mxu0 0.0
    %296 = vmatpush1.xpose.msra.mxu0 0.0
    %297 = vmatprep.subr.mxu0 0.0
    %298 = vmatpush1.xpose.msra.mxu0 0.0
    %299 = vmatprep.subr.mxu0 0.0
    %300 = vmatpush1.xpose.msra.mxu0 0.0
    %301 = vmatprep.mubr.f32.mxu0 0.0
    %302 = vmatmul.mubr.f32.gmra.mrb[0].mxu0 %v233
    %v303 = vpop.f32.mrb[0].mxu0
    %v304 = vadd.f32 0.0, %v303
    %v305 = vpop.f32.mrb[0].mxu0
    %306 = vdwg.mxu0
    %vm307 = vcmask 64512
    %v308 = vsel %vm307, %v227, -inf
    %309 = vmax.xlane.f32.xlu0 %v308
    %v310 = vpop.xlane.xlu0 %309
    %v311 = vsel %vm307, %v304, -inf
    %312 = vmax.xlane.f32.xlu0 %v311
    %v313 = vpop.xlane.xlu0 %312
    %v314 = vsub.f32 %v227, %v310
    %v315 = vsub.f32 %v304, %v313
    %v316 = vmul.f32 %v314, 1.442695
    %v317 = vpow.pop %v316
    %v318 = vmul.f32 %v315, 1.442695
    %v319 = vpow.pop %v318
    %v320 = vsel %vm307, %v317, 0.0
    %321 = vadd.xlane.f32.xlu0 %v320
    %v322 = vpop.xlane.xlu0 %321
    %v323 = vsel %vm307, %v319, 0.0
    %324 = vadd.xlane.f32.xlu0 %v323
    %v325 = vpop.xlane.xlu0 %324
    %v326 = vrcp.pop %v322
    %v327 = vmul.f32 %v317, %v326
    %v328 = vrcp.pop %v325
    %v329 = vmul.f32 %v319, %v328
    %330 = vrot.lane.b32.xlu0 %v145, 64
    %v331 = vpop.permute.xlu0 %330
    %v334 = vsel %vm307, %v327, 0
    %336 = vmatprep.subr.mxu0 0.0
    %337 = vmatpush1.msra.mxu0 %v331
    %338 = vmatprep.subr.mxu0 0.0
    %339 = vmatpush1.msra.mxu0 0.0
    %340 = vmatprep.subr.mxu0 0.0
    %341 = vmatpush1.msra.mxu0 0.0
    %342 = vmatprep.subr.mxu0 0.0
    %343 = vmatpush1.msra.mxu0 0.0
    %344 = vmatprep.subr.mxu0 0.0
    %345 = vmatpush1.msra.mxu0 0.0
    %346 = vmatprep.subr.mxu0 0.0
    %347 = vmatpush1.msra.mxu0 0.0
    %348 = vmatprep.subr.mxu0 0.0
    %349 = vmatpush1.msra.mxu0 0.0
    %350 = vmatprep.subr.mxu0 0.0
    %351 = vmatpush1.msra.mxu0 0.0
    %352 = vmatprep.subr.mxu0 0.0
    %353 = vmatpush1.msra.mxu0 0.0
    %354 = vmatprep.subr.mxu0 0.0
    %355 = vmatpush1.msra.mxu0 0.0
    %356 = vmatprep.subr.mxu0 0.0
    %357 = vmatpush1.msra.mxu0 0.0
    %358 = vmatprep.subr.mxu0 0.0
    %359 = vmatpush1.msra.mxu0 0.0
    %360 = vmatprep.subr.mxu0 0.0
    %361 = vmatpush1.msra.mxu0 0.0
    %362 = vmatprep.subr.mxu0 0.0
    %363 = vmatpush1.msra.mxu0 0.0
    %364 = vmatprep.subr.mxu0 0.0
    %365 = vmatpush1.msra.mxu0 0.0
    %366 = vmatprep.subr.mxu0 0.0
    %367 = vmatpush1.msra.mxu0 0.0
    %368 = vmatprep.subr.mxu0 0.0
    %369 = vmatpush1.msra.mxu0 0.0
    %370 = vmatprep.subr.mxu0 0.0
    %371 = vmatpush1.msra.mxu0 0.0
    %372 = vmatprep.subr.mxu0 0.0
    %373 = vmatpush1.msra.mxu0 0.0
    %374 = vmatprep.subr.mxu0 0.0
    %375 = vmatpush1.msra.mxu0 0.0
    %376 = vmatprep.subr.mxu0 0.0
    %377 = vmatpush1.msra.mxu0 0.0
    %378 = vmatprep.subr.mxu0 0.0
    %379 = vmatpush1.msra.mxu0 0.0
    %380 = vmatprep.subr.mxu0 0.0
    %381 = vmatpush1.msra.mxu0 0.0
    %382 = vmatprep.subr.mxu0 0.0
    %383 = vmatpush1.msra.mxu0 0.0
    %384 = vmatprep.subr.mxu0 0.0
    %385 = vmatpush1.msra.mxu0 0.0
    %386 = vmatprep.subr.mxu0 0.0
    %387 = vmatpush1.msra.mxu0 0.0
    %388 = vmatprep.subr.mxu0 0.0
    %389 = vmatpush1.msra.mxu0 0.0
    %390 = vmatprep.subr.mxu0 0.0
    %391 = vmatpush1.msra.mxu0 0.0
    %392 = vmatprep.subr.mxu0 0.0
    %393 = vmatpush1.msra.mxu0 0.0
    %394 = vmatprep.subr.mxu0 0.0
    %395 = vmatpush1.msra.mxu0 0.0
    %396 = vmatprep.subr.mxu0 0.0
    %397 = vmatpush1.msra.mxu0 0.0
    %398 = vmatprep.subr.mxu0 0.0
    %399 = vmatpush1.msra.mxu0 0.0
    %400 = vmatprep.mubr.f32.mxu0 0.0
    %401 = vmatmul.mubr.f32.gmra.mrb[0].mxu0 %v334
    %v402 = vpop.f32.mrb[0].mxu0
    %v403 = vadd.f32 0.0, %v402
    %v404 = vpop.f32.mrb[0].mxu0
    %405 = vdwg.mxu0
    %406 = vrot.lane.b32.xlu0 %v150, 64
    %v407 = vpop.permute.xlu0 %406
    %v410 = vsel %vm307, %v329, 0
    %412 = vmatprep.subr.mxu0 0.0
    %413 = vmatpush1.msra.mxu0 %v407
    %414 = vmatprep.subr.mxu0 0.0
    %415 = vmatpush1.msra.mxu0 0.0
    %416 = vmatprep.subr.mxu0 0.0
    %417 = vmatpush1.msra.mxu0 0.0
    %418 = vmatprep.subr.mxu0 0.0
    %419 = vmatpush1.msra.mxu0 0.0
    %420 = vmatprep.subr.mxu0 0.0
    %421 = vmatpush1.msra.mxu0 0.0
    %422 = vmatprep.subr.mxu0 0.0
    %423 = vmatpush1.msra.mxu0 0.0
    %424 = vmatprep.subr.mxu0 0.0
    %425 = vmatpush1.msra.mxu0 0.0
    %426 = vmatprep.subr.mxu0 0.0
    %427 = vmatpush1.msra.mxu0 0.0
    %428 = vmatprep.subr.mxu0 0.0
    %429 = vmatpush1.msra.mxu0 0.0
    %430 = vmatprep.subr.mxu0 0.0
    %431 = vmatpush1.msra.mxu0 0.0
    %432 = vmatprep.subr.mxu0 0.0
    %433 = vmatpush1.msra.mxu0 0.0
    %434 = vmatprep.subr.mxu0 0.0
    %435 = vmatpush1.msra.mxu0 0.0
    %436 = vmatprep.subr.mxu0 0.0
    %437 = vmatpush1.msra.mxu0 0.0
    %438 = vmatprep.subr.mxu0 0.0
    %439 = vmatpush1.msra.mxu0 0.0
    %440 = vmatprep.subr.mxu0 0.0
    %441 = vmatpush1.msra.mxu0 0.0
    %442 = vmatprep.subr.mxu0 0.0
    %443 = vmatpush1.msra.mxu0 0.0
    %444 = vmatprep.subr.mxu0 0.0
    %445 = vmatpush1.msra.mxu0 0.0
    %446 = vmatprep.subr.mxu0 0.0
    %447 = vmatpush1.msra.mxu0 0.0
    %448 = vmatprep.subr.mxu0 0.0
    %449 = vmatpush1.msra.mxu0 0.0
    %450 = vmatprep.subr.mxu0 0.0
    %451 = vmatpush1.msra.mxu0 0.0
    %452 = vmatprep.subr.mxu0 0.0
    %453 = vmatpush1.msra.mxu0 0.0
    %454 = vmatprep.subr.mxu0 0.0
    %455 = vmatpush1.msra.mxu0 0.0
    %456 = vmatprep.subr.mxu0 0.0
    %457 = vmatpush1.msra.mxu0 0.0
    %458 = vmatprep.subr.mxu0 0.0
    %459 = vmatpush1.msra.mxu0 0.0
    %460 = vmatprep.subr.mxu0 0.0
    %461 = vmatpush1.msra.mxu0 0.0
    %462 = vmatprep.subr.mxu0 0.0
    %463 = vmatpush1.msra.mxu0 0.0
    %464 = vmatprep.subr.mxu0 0.0
    %465 = vmatpush1.msra.mxu0 0.0
    %466 = vmatprep.subr.mxu0 0.0
    %467 = vmatpush1.msra.mxu0 0.0
    %468 = vmatprep.subr.mxu0 0.0
    %469 = vmatpush1.msra.mxu0 0.0
    %470 = vmatprep.subr.mxu0 0.0
    %471 = vmatpush1.msra.mxu0 0.0
    %472 = vmatprep.subr.mxu0 0.0
    %473 = vmatpush1.msra.mxu0 0.0
    %474 = vmatprep.subr.mxu0 0.0
    %475 = vmatpush1.msra.mxu0 0.0
    %476 = vmatprep.mubr.f32.mxu0 0.0
    %477 = vmatmul.mubr.f32.gmra.mrb[0].mxu0 %v410
    %v478 = vpop.f32.mrb[0].mxu0
    %v479 = vadd.f32 0.0, %v478
    %v480 = vpop.f32.mrb[0].mxu0
    %481 = vdwg.mxu0
    %486 = vrot.lane.b32.xlu0 %v61, 32
    %v487 = vpop.permute.xlu0 %486
    %488 = vrot.lane.b32.xlu0 %v62, 32
    %v489 = vpop.permute.xlu0 %488
    %490 = vrot.lane.b32.xlu0 %v63, 32
    %v491 = vpop.permute.xlu0 %490
    %492 = vrot.lane.b32.xlu0 %v64, 32
    %v493 = vpop.permute.xlu0 %492
    %v499 = vsel %vm71, %v403, 0
    %v502 = vsel %vm71, %v479, 0
    %504 = vmatprep.subr.mxu0 0.0
    %505 = vmatpush1.msra.mxu0 %v487
    %506 = vmatprep.subr.mxu0 0.0
    %507 = vmatpush1.msra.mxu0 %v489
    %508 = vmatprep.subr.mxu0 0.0
    %509 = vmatpush1.msra.mxu0 %v491
    %510 = vmatprep.subr.mxu0 0.0
    %511 = vmatpush1.msra.mxu0 %v493
    %512 = vmatprep.subr.mxu0 0.0
    %513 = vmatpush1.msra.mxu0 0.0
    %514 = vmatprep.subr.mxu0 0.0
    %515 = vmatpush1.msra.mxu0 0.0
    %516 = vmatprep.subr.mxu0 0.0
    %517 = vmatpush1.msra.mxu0 0.0
    %518 = vmatprep.subr.mxu0 0.0
    %519 = vmatpush1.msra.mxu0 0.0
    %520 = vmatprep.subr.mxu0 0.0
    %521 = vmatpush1.msra.mxu0 0.0
    %522 = vmatprep.subr.mxu0 0.0
    %523 = vmatpush1.msra.mxu0 0.0
    %524 = vmatprep.subr.mxu0 0.0
    %525 = vmatpush1.msra.mxu0 0.0
    %526 = vmatprep.subr.mxu0 0.0
    %527 = vmatpush1.msra.mxu0 0.0
    %528 = vmatprep.subr.mxu0 0.0
    %529 = vmatpush1.msra.mxu0 0.0
    %530 = vmatprep.subr.mxu0 0.0
    %531 = vmatpush1.msra.mxu0 0.0
    %532 = vmatprep.subr.mxu0 0.0
    %533 = vmatpush1.msra.mxu0 0.0
    %534 = vmatprep.subr.mxu0 0.0
    %535 = vmatpush1.msra.mxu0 0.0
    %536 = vmatprep.subr.mxu0 0.0
    %537 = vmatpush1.msra.mxu0 0.0
    %538 = vmatprep.subr.mxu0 0.0
    %539 = vmatpush1.msra.mxu0 0.0
    %540 = vmatprep.subr.mxu0 0.0
    %541 = vmatpush1.msra.mxu0 0.0
    %542 = vmatprep.subr.mxu0 0.0
    %543 = vmatpush1.msra.mxu0 0.0
    %544 = vmatprep.subr.mxu0 0.0
    %545 = vmatpush1.msra.mxu0 0.0
    %546 = vmatprep.subr.mxu0 0.0
    %547 = vmatpush1.msra.mxu0 0.0
    %548 = vmatprep.subr.mxu0 0.0
    %549 = vmatpush1.msra.mxu0 0.0
    %550 = vmatprep.subr.mxu0 0.0
    %551 = vmatpush1.msra.mxu0 0.0
    %552 = vmatprep.subr.mxu0 0.0
    %553 = vmatpush1.msra.mxu0 0.0
    %554 = vmatprep.subr.mxu0 0.0
    %555 = vmatpush1.msra.mxu0 0.0
    %556 = vmatprep.subr.mxu0 0.0
    %557 = vmatpush1.msra.mxu0 0.0
    %558 = vmatprep.subr.mxu0 0.0
    %559 = vmatpush1.msra.mxu0 0.0
    %560 = vmatprep.subr.mxu0 0.0
    %561 = vmatpush1.msra.mxu0 0.0
    %562 = vmatprep.subr.mxu0 0.0
    %563 = vmatpush1.msra.mxu0 0.0
    %564 = vmatprep.subr.mxu0 0.0
    %565 = vmatpush1.msra.mxu0 0.0
    %566 = vmatprep.subr.mxu0 0.0
    %567 = vmatpush1.msra.mxu0 0.0
    %568 = vmatprep.mubr.f32.mxu0 0.0
    %569 = vmatmul.mubr.f32.gmra.mrb[0].mxu0 %v499
    %v570 = vpop.f32.mrb[0].mxu0
    %v571 = vadd.f32 %v59, %v570
    %v572 = vpop.f32.mrb[0].mxu0
    %573 = vmatprep.mubr.f32.mxu0 0.0
    %574 = vmatmul.mubr.f32.gmra.mrb[0].mxu0 %v502
    %v575 = vpop.f32.mrb[0].mxu0
    %v576 = vadd.f32 %v60, %v575
    %v577 = vpop.f32.mrb[0].mxu0
    %578 = vdwg.mxu0
    %v579 = vsel %vm71, %v571, 0.0
    %580 = vadd.xlane.f32.xlu0 %v579
    %v581 = vpop.xlane.xlu0 %580
    %v582 = vsel %vm71, %v576, 0.0
    %583 = vadd.xlane.f32.xlu0 %v582
    %v584 = vpop.xlane.xlu0 %583
    %v585 = vrcp.pop 32.0
    %v586 = vmul.f32 %v581, %v585
    %v587 = vmul.f32 %v584, %v585
    %v588 = vmul.f32 %v571, %v571
    %v589 = vmul.f32 %v576, %v576
    %v590 = vsel %vm71, %v588, 0.0
    %591 = vadd.xlane.f32.xlu0 %v590
    %v592 = vpop.xlane.xlu0 %591
    %v593 = vsel %vm71, %v589, 0.0
    %594 = vadd.xlane.f32.xlu0 %v593
    %v595 = vpop.xlane.xlu0 %594
    %v596 = vmul.f32 %v592, %v585
    %v597 = vmul.f32 %v595, %v585
    %v598 = vmul.f32 %v586, %v586
    %v599 = vmul.f32 %v587, %v587
    %v600 = vsub.f32 %v596, %v598
    %v601 = vsub.f32 %v597, %v599
    %v602 = vsub.f32 %v571, %v586
    %v603 = vsub.f32 %v576, %v587
    %v604 = vadd.f32 %v600, 1e-05
    %v605 = vadd.f32 %v601, 1e-05
    %v606 = vrsqrt.pop %v604
    %v607 = vrsqrt.pop %v605
    %v608 = vmul.f32 %v602, %v606
    %v609 = vmul.f32 %v603, %v607
    %v610 = vlaneseq
    %v611 = vshrl.u32 %v610, 7
    %v612 = vsub.s32 0, %v611
    %v613 = vrot.slane %v67, %v612
    %v614 = vmul.f32 %v608, %v613
    %v615 = vmul.f32 %v609, %v613
    %v616 = vlaneseq
    %v617 = vshrl.u32 %v616, 7
    %v618 = vsub.s32 0, %v617
    %v619 = vrot.slane %v68, %v618
    %v620 = vadd.f32 %v614, %v619
    %v621 = vadd.f32 %v615, %v619
    %v622 = vlaneseq
    %v623 = vshrl.u32 %v622, 7
    %v624 = vsub.s32 0, %v623
    %v625 = vrot.slane %v65, %v624
    %v626 = vmul.f32 %v620, %v625
    %v627 = vmul.f32 %v621, %v625
    %v628 = vsel %vm71, %v626, 0.0
    %629 = vadd.xlane.f32.xlu0 %v628
    %v630 = vpop.xlane.xlu0 %629
    %v631 = vsel %vm71, %v627, 0.0
    %632 = vadd.xlane.f32.xlu0 %v631
    %v633 = vpop.xlane.xlu0 %632
    %v634 = vmax.f32 %v630, 0.0
    %v635 = vmax.f32 %v633, 0.0
    %v636 = vlaneseq
    %v637 = vshrl.u32 %v636, 7
    %v638 = vsub.s32 0, %v637
    %v639 = vrot.slane %v66, %v638
    %v640 = vmul.f32 %v634, %v639
    %v641 = vmul.f32 %v635, %v639
    %v642 = vadd.f32 %v640, %v620
    %v643 = vadd.f32 %v641, %v621
    %v644 = vsel %vm71, %v642, 0.0
    %645 = vadd.xlane.f32.xlu0 %v644
    %v646 = vpop.xlane.xlu0 %645
    %v647 = vsel %vm71, %v643, 0.0
    %648 = vadd.xlane.f32.xlu0 %v647
    %v649 = vpop.xlane.xlu0 %648
    %v650 = vmul.f32 %v646, %v585
    %v651 = vmul.f32 %v649, %v585
    %v652 = vmul.f32 %v642, %v642
    %v653 = vmul.f32 %v643, %v643
    %v654 = vsel %vm71, %v652, 0.0
    %655 = vadd.xlane.f32.xlu0 %v654
    %v656 = vpop.xlane.xlu0 %655
    %v657 = vsel %vm71, %v653, 0.0
    %658 = vadd.xlane.f32.xlu0 %v657
    %v659 = vpop.xlane.xlu0 %658
    %v660 = vmul.f32 %v656, %v585
    %v661 = vmul.f32 %v659, %v585
    %v662 = vmul.f32 %v650, %v650
    %v663 = vmul.f32 %v651, %v651
    %v664 = vsub.f32 %v660, %v662
    %v665 = vsub.f32 %v661, %v663
    %v666 = vsub.f32 %v642, %v650
    %v667 = vsub.f32 %v643, %v651
    %v668 = vadd.f32 %v664, 1e-05
    %v669 = vadd.f32 %v665, 1e-05
    %v670 = vrsqrt.pop %v668
    %v671 = vrsqrt.pop %v669
    %v672 = vmul.f32 %v666, %v670
    %v673 = vmul.f32 %v667, %v671
    %v674 = vlaneseq
    %v675 = vshrl.u32 %v674, 7
    %v676 = vsub.s32 0, %v675
    %v677 = vrot.slane %v69, %v676
    %v678 = vmul.f32 %v672, %v677
    %v679 = vmul.f32 %v673, %v677
    %v680 = vlaneseq
    %v681 = vshrl.u32 %v680, 7
    %v682 = vsub.s32 0, %v681
    %v683 = vrot.slane %v70, %v682
    %v684 = vadd.f32 %v678, %v683
    %v685 = vadd.f32 %v679, %v683
    %s686 = scalar_lea.vmem [#allocation5], 32
    %v687 = vld [vmem:[%s686] sm:$0xff]
    %v688 = vld [vmem:[%s686 + $0x8] sm:$0xff]
    %v689 = vld [vmem:[%s686 + $0x10] sm:$0xff]
    %v690 = vld [vmem:[%s686 + $0x18] sm:$0xff]
    %v691 = vld [vmem:[#allocation7 + $0xe] sm:$0x1]
    %v692 = vld [vmem:[#allocation7 + $0xf] sm:$0x1]
    %v693 = vld [vmem:[#allocation7 + $0x10] sm:$0x1]
    %v694 = vld [vmem:[#allocation7 + $0x11] sm:$0x1]
    %v695 = vld [vmem:[#allocation7 + $0x12] sm:$0x1]
    %v696 = vld [vmem:[#allocation7 + $0x13] sm:$0x1]
    %v698 = vsel %vm71, %v684, 0
    %v701 = vsel %vm71, %v685, 0
    %703 = vmatprep.subr.mxu0 0.0
    %704 = vmatpush1.msra.mxu0 %v687
    %705 = vmatprep.subr.mxu0 0.0
    %706 = vmatpush1.msra.mxu0 %v688
    %707 = vmatprep.subr.mxu0 0.0
    %708 = vmatpush1.msra.mxu0 %v689
    %709 = vmatprep.subr.mxu0 0.0
    %710 = vmatpush1.msra.mxu0 %v690
    %711 = vmatprep.subr.mxu0 0.0
    %712 = vmatpush1.msra.mxu0 0.0
    %713 = vmatprep.subr.mxu0 0.0
    %714 = vmatpush1.msra.mxu0 0.0
    %715 = vmatprep.subr.mxu0 0.0
    %716 = vmatpush1.msra.mxu0 0.0
    %717 = vmatprep.subr.mxu0 0.0
    %718 = vmatpush1.msra.mxu0 0.0
    %719 = vmatprep.subr.mxu0 0.0
    %720 = vmatpush1.msra.mxu0 0.0
    %721 = vmatprep.subr.mxu0 0.0
    %722 = vmatpush1.msra.mxu0 0.0
    %723 = vmatprep.subr.mxu0 0.0
    %724 = vmatpush1.msra.mxu0 0.0
    %725 = vmatprep.subr.mxu0 0.0
    %726 = vmatpush1.msra.mxu0 0.0
    %727 = vmatprep.subr.mxu0 0.0
    %728 = vmatpush1.msra.mxu0 0.0
    %729 = vmatprep.subr.mxu0 0.0
    %730 = vmatpush1.msra.mxu0 0.0
    %731 = vmatprep.subr.mxu0 0.0
    %732 = vmatpush1.msra.mxu0 0.0
    %733 = vmatprep.subr.mxu0 0.0
    %734 = vmatpush1.msra.mxu0 0.0
    %735 = vmatprep.subr.mxu0 0.0
    %736 = vmatpush1.msra.mxu0 0.0
    %737 = vmatprep.subr.mxu0 0.0
    %738 = vmatpush1.msra.mxu0 0.0
    %739 = vmatprep.subr.mxu0 0.0
    %740 = vmatpush1.msra.mxu0 0.0
    %741 = vmatprep.subr.mxu0 0.0
    %742 = vmatpush1.msra.mxu0 0.0
    %743 = vmatprep.subr.mxu0 0.0
    %744 = vmatpush1.msra.mxu0 0.0
    %745 = vmatprep.subr.mxu0 0.0
    %746 = vmatpush1.msra.mxu0 0.0
    %747 = vmatprep.subr.mxu0 0.0
    %748 = vmatpush1.msra.mxu0 0.0
    %749 = vmatprep.subr.mxu0 0.0
    %750 = vmatpush1.msra.mxu0 0.0
    %751 = vmatprep.subr.mxu0 0.0
    %752 = vmatpush1.msra.mxu0 0.0
    %753 = vmatprep.subr.mxu0 0.0
    %754 = vmatpush1.msra.mxu0 0.0
    %755 = vmatprep.subr.mxu0 0.0
    %756 = vmatpush1.msra.mxu0 0.0
    %757 = vmatprep.subr.mxu0 0.0
    %758 = vmatpush1.msra.mxu0 0.0
    %759 = vmatprep.subr.mxu0 0.0
    %760 = vmatpush1.msra.mxu0 0.0
    %761 = vmatprep.subr.mxu0 0.0
    %762 = vmatpush1.msra.mxu0 0.0
    %763 = vmatprep.subr.mxu0 0.0
    %764 = vmatpush1.msra.mxu0 0.0
    %765 = vmatprep.subr.mxu0 0.0
    %766 = vmatpush1.msra.mxu0 0.0
    %767 = vmatprep.mubr.f32.mxu0 0.0
    %768 = vmatmul.mubr.f32.gmra.mrb[0].mxu0 %v698
    %v769 = vpop.f32.mrb[0].mxu0
    %v770 = vadd.f32 0.0, %v769
    %v771 = vpop.f32.mrb[0].mxu0
    %772 = vmatprep.mubr.f32.mxu0 0.0
    %773 = vmatmul.mubr.f32.gmra.mrb[0].mxu0 %v701
    %v774 = vpop.f32.mrb[0].mxu0
    %v775 = vadd.f32 0.0, %v774
    %v776 = vpop.f32.mrb[0].mxu0
    %777 = vdwg.mxu0
    %779 = vrot.lane.b32.xlu0 %v770, 96
    %v780 = vpop.permute.xlu0 %779
    %v781 = vsel %vm71, %v770, 0
    %v783 = vsel %vm71, %v780, 0
    %785 = vmatprep.subr.mxu0 0.0
    %786 = vmatpush1.xpose.msra.mxu0 %v783
    %787 = vmatprep.subr.mxu0 0.0
    %788 = vmatpush1.xpose.msra.mxu0 0.0
    %789 = vmatprep.subr.mxu0 0.0
    %790 = vmatpush1.xpose.msra.mxu0 0.0
    %791 = vmatprep.subr.mxu0 0.0
    %792 = vmatpush1.xpose.msra.mxu0 0.0
    %793 = vmatprep.subr.mxu0 0.0
    %794 = vmatpush1.xpose.msra.mxu0 0.0
    %795 = vmatprep.subr.mxu0 0.0
    %796 = vmatpush1.xpose.msra.mxu0 0.0
    %797 = vmatprep.subr.mxu0 0.0
    %798 = vmatpush1.xpose.msra.mxu0 0.0
    %799 = vmatprep.subr.mxu0 0.0
    %800 = vmatpush1.xpose.msra.mxu0 0.0
    %801 = vmatprep.subr.mxu0 0.0
    %802 = vmatpush1.xpose.msra.mxu0 0.0
    %803 = vmatprep.subr.mxu0 0.0
    %804 = vmatpush1.xpose.msra.mxu0 0.0
    %805 = vmatprep.subr.mxu0 0.0
    %806 = vmatpush1.xpose.msra.mxu0 0.0
    %807 = vmatprep.subr.mxu0 0.0
    %808 = vmatpush1.xpose.msra.mxu0 0.0
    %809 = vmatprep.subr.mxu0 0.0
    %810 = vmatpush1.xpose.msra.mxu0 0.0
    %811 = vmatprep.subr.mxu0 0.0
    %812 = vmatpush1.xpose.msra.mxu0 0.0
    %813 = vmatprep.subr.mxu0 0.0
    %814 = vmatpush1.xpose.msra.mxu0 0.0
    %815 = vmatprep.subr.mxu0 0.0
    %816 = vmatpush1.xpose.msra.mxu0 0.0
    %817 = vmatprep.subr.mxu0 0.0
    %818 = vmatpush1.xpose.msra.mxu0 0.0
    %819 = vmatprep.subr.mxu0 0.0
    %820 = vmatpush1.xpose.msra.mxu0 0.0
    %821 = vmatprep.subr.mxu0 0.0
    %822 = vmatpush1.xpose.msra.mxu0 0.0
    %823 = vmatprep.subr.mxu0 0.0
    %824 = vmatpush1.xpose.msra.mxu0 0.0
    %825 = vmatprep.subr.mxu0 0.0
    %826 = vmatpush1.xpose.msra.mxu0 0.0
    %827 = vmatprep.subr.mxu0 0.0
    %828 = vmatpush1.xpose.msra.mxu0 0.0
    %829 = vmatprep.subr.mxu0 0.0
    %830 = vmatpush1.xpose.msra.mxu0 0.0
    %831 = vmatprep.subr.mxu0 0.0
    %832 = vmatpush1.xpose.msra.mxu0 0.0
    %833 = vmatprep.subr.mxu0 0.0
    %834 = vmatpush1.xpose.msra.mxu0 0.0
    %835 = vmatprep.subr.mxu0 0.0
    %836 = vmatpush1.xpose.msra.mxu0 0.0
    %837 = vmatprep.subr.mxu0 0.0
    %838 = vmatpush1.xpose.msra.mxu0 0.0
    %839 = vmatprep.subr.mxu0 0.0
    %840 = vmatpush1.xpose.msra.mxu0 0.0
    %841 = vmatprep.subr.mxu0 0.0
    %842 = vmatpush1.xpose.msra.mxu0 0.0
    %843 = vmatprep.subr.mxu0 0.0
    %844 = vmatpush1.xpose.msra.mxu0 0.0
    %845 = vmatprep.subr.mxu0 0.0
    %846 = vmatpush1.xpose.msra.mxu0 0.0
    %847 = vmatprep.subr.mxu0 0.0
    %848 = vmatpush1.xpose.msra.mxu0 0.0
    %849 = vmatprep.mubr.f32.mxu0 0.0
    %850 = vmatmul.mubr.f32.gmra.mrb[0].mxu0 %v781
    %v851 = vpop.f32.mrb[0].mxu0
    %v852 = vadd.f32 0.0, %v851
    %v853 = vpop.f32.mrb[0].mxu0
    %854 = vdwg.mxu0
    %856 = vrot.lane.b32.xlu0 %v775, 96
    %v857 = vpop.permute.xlu0 %856
    %v858 = vsel %vm71, %v775, 0
    %v860 = vsel %vm71, %v857, 0
    %862 = vmatprep.subr.mxu0 0.0
    %863 = vmatpush1.xpose.msra.mxu0 %v860
    %864 = vmatprep.subr.mxu0 0.0
    %865 = vmatpush1.xpose.msra.mxu0 0.0
    %866 = vmatprep.subr.mxu0 0.0
    %867 = vmatpush1.xpose.msra.mxu0 0.0
    %868 = vmatprep.subr.mxu0 0.0
    %869 = vmatpush1.xpose.msra.mxu0 0.0
    %870 = vmatprep.subr.mxu0 0.0
    %871 = vmatpush1.xpose.msra.mxu0 0.0
    %872 = vmatprep.subr.mxu0 0.0
    %873 = vmatpush1.xpose.msra.mxu0 0.0
    %874 = vmatprep.subr.mxu0 0.0
    %875 = vmatpush1.xpose.msra.mxu0 0.0
    %876 = vmatprep.subr.mxu0 0.0
    %877 = vmatpush1.xpose.msra.mxu0 0.0
    %878 = vmatprep.subr.mxu0 0.0
    %879 = vmatpush1.xpose.msra.mxu0 0.0
    %880 = vmatprep.subr.mxu0 0.0
    %881 = vmatpush1.xpose.msra.mxu0 0.0
    %882 = vmatprep.subr.mxu0 0.0
    %883 = vmatpush1.xpose.msra.mxu0 0.0
    %884 = vmatprep.subr.mxu0 0.0
    %885 = vmatpush1.xpose.msra.mxu0 0.0
    %886 = vmatprep.subr.mxu0 0.0
    %887 = vmatpush1.xpose.msra.mxu0 0.0
    %888 = vmatprep.subr.mxu0 0.0
    %889 = vmatpush1.xpose.msra.mxu0 0.0
    %890 = vmatprep.subr.mxu0 0.0
    %891 = vmatpush1.xpose.msra.mxu0 0.0
    %892 = vmatprep.subr.mxu0 0.0
    %893 = vmatpush1.xpose.msra.mxu0 0.0
    %894 = vmatprep.subr.mxu0 0.0
    %895 = vmatpush1.xpose.msra.mxu0 0.0
    %896 = vmatprep.subr.mxu0 0.0
    %897 = vmatpush1.xpose.msra.mxu0 0.0
    %898 = vmatprep.subr.mxu0 0.0
    %899 = vmatpush1.xpose.msra.mxu0 0.0
    %900 = vmatprep.subr.mxu0 0.0
    %901 = vmatpush1.xpose.msra.mxu0 0.0
    %902 = vmatprep.subr.mxu0 0.0
    %903 = vmatpush1.xpose.msra.mxu0 0.0
    %904 = vmatprep.subr.mxu0 0.0
    %905 = vmatpush1.xpose.msra.mxu0 0.0
    %906 = vmatprep.subr.mxu0 0.0
    %907 = vmatpush1.xpose.msra.mxu0 0.0
    %908 = vmatprep.subr.mxu0 0.0
    %909 = vmatpush1.xpose.msra.mxu0 0.0
    %910 = vmatprep.subr.mxu0 0.0
    %911 = vmatpush1.xpose.msra.mxu0 0.0
    %912 = vmatprep.subr.mxu0 0.0
    %913 = vmatpush1.xpose.msra.mxu0 0.0
    %914 = vmatprep.subr.mxu0 0.0
    %915 = vmatpush1.xpose.msra.mxu0 0.0
    %916 = vmatprep.subr.mxu0 0.0
    %917 = vmatpush1.xpose.msra.mxu0 0.0
    %918 = vmatprep.subr.mxu0 0.0
    %919 = vmatpush1.xpose.msra.mxu0 0.0
    %920 = vmatprep.subr.mxu0 0.0
    %921 = vmatpush1.xpose.msra.mxu0 0.0
    %922 = vmatprep.subr.mxu0 0.0
    %923 = vmatpush1.xpose.msra.mxu0 0.0
    %924 = vmatprep.subr.mxu0 0.0
    %925 = vmatpush1.xpose.msra.mxu0 0.0
    %926 = vmatprep.mubr.f32.mxu0 0.0
    %927 = vmatmul.mubr.f32.gmra.mrb[0].mxu0 %v858
    %v928 = vpop.f32.mrb[0].mxu0
    %v929 = vadd.f32 0.0, %v928
    %v930 = vpop.f32.mrb[0].mxu0
    %931 = vdwg.mxu0
    %v932 = vsel %vm307, %v852, -inf
    %933 = vmax.xlane.f32.xlu0 %v932
    %v934 = vpop.xlane.xlu0 %933
    %v935 = vsel %vm307, %v929, -inf
    %936 = vmax.xlane.f32.xlu0 %v935
    %v937 = vpop.xlane.xlu0 %936
    %v938 = vsub.f32 %v852, %v934
    %v939 = vsub.f32 %v929, %v937
    %v940 = vmul.f32 %v938, 1.442695
    %v941 = vpow.pop %v940
    %v942 = vmul.f32 %v939, 1.442695
    %v943 = vpow.pop %v942
    %v944 = vsel %vm307, %v941, 0.0
    %945 = vadd.xlane.f32.xlu0 %v944
    %v946 = vpop.xlane.xlu0 %945
    %v947 = vsel %vm307, %v943, 0.0
    %948 = vadd.xlane.f32.xlu0 %v947
    %v949 = vpop.xlane.xlu0 %948
    %v950 = vrcp.pop %v946
    %v951 = vmul.f32 %v941, %v950
    %v952 = vrcp.pop %v949
    %v953 = vmul.f32 %v943, %v952
    %954 = vrot.lane.b32.xlu0 %v770, 64
    %v955 = vpop.permute.xlu0 %954
    %v958 = vsel %vm307, %v951, 0
    %960 = vmatprep.subr.mxu0 0.0
    %961 = vmatpush1.msra.mxu0 %v955
    %962 = vmatprep.subr.mxu0 0.0
    %963 = vmatpush1.msra.mxu0 0.0
    %964 = vmatprep.subr.mxu0 0.0
    %965 = vmatpush1.msra.mxu0 0.0
    %966 = vmatprep.subr.mxu0 0.0
    %967 = vmatpush1.msra.mxu0 0.0
    %968 = vmatprep.subr.mxu0 0.0
    %969 = vmatpush1.msra.mxu0 0.0
    %970 = vmatprep.subr.mxu0 0.0
    %971 = vmatpush1.msra.mxu0 0.0
    %972 = vmatprep.subr.mxu0 0.0
    %973 = vmatpush1.msra.mxu0 0.0
    %974 = vmatprep.subr.mxu0 0.0
    %975 = vmatpush1.msra.mxu0 0.0
    %976 = vmatprep.subr.mxu0 0.0
    %977 = vmatpush1.msra.mxu0 0.0
    %978 = vmatprep.subr.mxu0 0.0
    %979 = vmatpush1.msra.mxu0 0.0
    %980 = vmatprep.subr.mxu0 0.0
    %981 = vmatpush1.msra.mxu0 0.0
    %982 = vmatprep.subr.mxu0 0.0
    %983 = vmatpush1.msra.mxu0 0.0
    %984 = vmatprep.subr.mxu0 0.0
    %985 = vmatpush1.msra.mxu0 0.0
    %986 = vmatprep.subr.mxu0 0.0
    %987 = vmatpush1.msra.mxu0 0.0
    %988 = vmatprep.subr.mxu0 0.0
    %989 = vmatpush1.msra.mxu0 0.0
    %990 = vmatprep.subr.mxu0 0.0
    %991 = vmatpush1.msra.mxu0 0.0
    %992 = vmatprep.subr.mxu0 0.0
    %993 = vmatpush1.msra.mxu0 0.0
    %994 = vmatprep.subr.mxu0 0.0
    %995 = vmatpush1.msra.mxu0 0.0
    %996 = vmatprep.subr.mxu0 0.0
    %997 = vmatpush1.msra.mxu0 0.0
    %998 = vmatprep.subr.mxu0 0.0
    %999 = vmatpush1.msra.mxu0 0.0
    %1000 = vmatprep.subr.mxu0 0.0
    %1001 = vmatpush1.msra.mxu0 0.0
    %1002 = vmatprep.subr.mxu0 0.0
    %1003 = vmatpush1.msra.mxu0 0.0
    %1004 = vmatprep.subr.mxu0 0.0
    %1005 = vmatpush1.msra.mxu0 0.0
    %1006 = vmatprep.subr.mxu0 0.0
    %1007 = vmatpush1.msra.mxu0 0.0
    %1008 = vmatprep.subr.mxu0 0.0
    %1009 = vmatpush1.msra.mxu0 0.0
    %1010 = vmatprep.subr.mxu0 0.0
    %1011 = vmatpush1.msra.mxu0 0.0
    %1012 = vmatprep.subr.mxu0 0.0
    %1013 = vmatpush1.msra.mxu0 0.0
    %1014 = vmatprep.subr.mxu0 0.0
    %1015 = vmatpush1.msra.mxu0 0.0
    %1016 = vmatprep.subr.mxu0 0.0
    %1017 = vmatpush1.msra.mxu0 0.0
    %1018 = vmatprep.subr.mxu0 0.0
    %1019 = vmatpush1.msra.mxu0 0.0
    %1020 = vmatprep.subr.mxu0 0.0
    %1021 = vmatpush1.msra.mxu0 0.0
    %1022 = vmatprep.subr.mxu0 0.0
    %1023 = vmatpush1.msra.mxu0 0.0
    %1024 = vmatprep.mubr.f32.mxu0 0.0
    %1025 = vmatmul.mubr.f32.gmra.mrb[0].mxu0 %v958
    %v1026 = vpop.f32.mrb[0].mxu0
    %v1027 = vadd.f32 0.0, %v1026
    %v1028 = vpop.f32.mrb[0].mxu0
    %1029 = vdwg.mxu0
    %1030 = vrot.lane.b32.xlu0 %v775, 64
    %v1031 = vpop.permute.xlu0 %1030
    %v1034 = vsel %vm307, %v953, 0
    %1036 = vmatprep.subr.mxu0 0.0
    %1037 = vmatpush1.msra.mxu0 %v1031
    %1038 = vmatprep.subr.mxu0 0.0
    %1039 = vmatpush1.msra.mxu0 0.0
    %1040 = vmatprep.subr.mxu0 0.0
    %1041 = vmatpush1.msra.mxu0 0.0
    %1042 = vmatprep.subr.mxu0 0.0
    %1043 = vmatpush1.msra.mxu0 0.0
    %1044 = vmatprep.subr.mxu0 0.0
    %1045 = vmatpush1.msra.mxu0 0.0
    %1046 = vmatprep.subr.mxu0 0.0
    %1047 = vmatpush1.msra.mxu0 0.0
    %1048 = vmatprep.subr.mxu0 0.0
    %1049 = vmatpush1.msra.mxu0 0.0
    %1050 = vmatprep.subr.mxu0 0.0
    %1051 = vmatpush1.msra.mxu0 0.0
    %1052 = vmatprep.subr.mxu0 0.0
    %1053 = vmatpush1.msra.mxu0 0.0
    %1054 = vmatprep.subr.mxu0 0.0
    %1055 = vmatpush1.msra.mxu0 0.0
    %1056 = vmatprep.subr.mxu0 0.0
    %1057 = vmatpush1.msra.mxu0 0.0
    %1058 = vmatprep.subr.mxu0 0.0
    %1059 = vmatpush1.msra.mxu0 0.0
    %1060 = vmatprep.subr.mxu0 0.0
    %1061 = vmatpush1.msra.mxu0 0.0
    %1062 = vmatprep.subr.mxu0 0.0
    %1063 = vmatpush1.msra.mxu0 0.0
    %1064 = vmatprep.subr.mxu0 0.0
    %1065 = vmatpush1.msra.mxu0 0.0
    %1066 = vmatprep.subr.mxu0 0.0
    %1067 = vmatpush1.msra.mxu0 0.0
    %1068 = vmatprep.subr.mxu0 0.0
    %1069 = vmatpush1.msra.mxu0 0.0
    %1070 = vmatprep.subr.mxu0 0.0
    %1071 = vmatpush1.msra.mxu0 0.0
    %1072 = vmatprep.subr.mxu0 0.0
    %1073 = vmatpush1.msra.mxu0 0.0
    %1074 = vmatprep.subr.mxu0 0.0
    %1075 = vmatpush1.msra.mxu0 0.0
    %1076 = vmatprep.subr.mxu0 0.0
    %1077 = vmatpush1.msra.mxu0 0.0
    %1078 = vmatprep.subr.mxu0 0.0
    %1079 = vmatpush1.msra.mxu0 0.0
    %1080 = vmatprep.subr.mxu0 0.0
    %1081 = vmatpush1.msra.mxu0 0.0
    %1082 = vmatprep.subr.mxu0 0.0
    %1083 = vmatpush1.msra.mxu0 0.0
    %1084 = vmatprep.subr.mxu0 0.0
    %1085 = vmatpush1.msra.mxu0 0.0
    %1086 = vmatprep.subr.mxu0 0.0
    %1087 = vmatpush1.msra.mxu0 0.0
    %1088 = vmatprep.subr.mxu0 0.0
    %1089 = vmatpush1.msra.mxu0 0.0
    %1090 = vmatprep.subr.mxu0 0.0
    %1091 = vmatpush1.msra.mxu0 0.0
    %1092 = vmatprep.subr.mxu0 0.0
    %1093 = vmatpush1.msra.mxu0 0.0
    %1094 = vmatprep.subr.mxu0 0.0
    %1095 = vmatpush1.msra.mxu0 0.0
    %1096 = vmatprep.subr.mxu0 0.0
    %1097 = vmatpush1.msra.mxu0 0.0
    %1098 = vmatprep.subr.mxu0 0.0
    %1099 = vmatpush1.msra.mxu0 0.0
    %1100 = vmatprep.mubr.f32.mxu0 0.0
    %1101 = vmatmul.mubr.f32.gmra.mrb[0].mxu0 %v1034
    %v1102 = vpop.f32.mrb[0].mxu0
    %v1103 = vadd.f32 0.0, %v1102
    %v1104 = vpop.f32.mrb[0].mxu0
    %1105 = vdwg.mxu0
    %1110 = vrot.lane.b32.xlu0 %v687, 32
    %v1111 = vpop.permute.xlu0 %1110
    %1112 = vrot.lane.b32.xlu0 %v688, 32
    %v1113 = vpop.permute.xlu0 %1112
    %1114 = vrot.lane.b32.xlu0 %v689, 32
    %v1115 = vpop.permute.xlu0 %1114
    %1116 = vrot.lane.b32.xlu0 %v690, 32
    %v1117 = vpop.permute.xlu0 %1116
    %v1123 = vsel %vm71, %v1027, 0
    %v1126 = vsel %vm71, %v1103, 0
    %1128 = vmatprep.subr.mxu0 0.0
    %1129 = vmatpush1.msra.mxu0 %v1111
    %1130 = vmatprep.subr.mxu0 0.0
    %1131 = vmatpush1.msra.mxu0 %v1113
    %1132 = vmatprep.subr.mxu0 0.0
    %1133 = vmatpush1.msra.mxu0 %v1115
    %1134 = vmatprep.subr.mxu0 0.0
    %1135 = vmatpush1.msra.mxu0 %v1117
    %1136 = vmatprep.subr.mxu0 0.0
    %1137 = vmatpush1.msra.mxu0 0.0
    %1138 = vmatprep.subr.mxu0 0.0
    %1139 = vmatpush1.msra.mxu0 0.0
    %1140 = vmatprep.subr.mxu0 0.0
    %1141 = vmatpush1.msra.mxu0 0.0
    %1142 = vmatprep.subr.mxu0 0.0
    %1143 = vmatpush1.msra.mxu0 0.0
    %1144 = vmatprep.subr.mxu0 0.0
    %1145 = vmatpush1.msra.mxu0 0.0
    %1146 = vmatprep.subr.mxu0 0.0
    %1147 = vmatpush1.msra.mxu0 0.0
    %1148 = vmatprep.subr.mxu0 0.0
    %1149 = vmatpush1.msra.mxu0 0.0
    %1150 = vmatprep.subr.mxu0 0.0
    %1151 = vmatpush1.msra.mxu0 0.0
    %1152 = vmatprep.subr.mxu0 0.0
    %1153 = vmatpush1.msra.mxu0 0.0
    %1154 = vmatprep.subr.mxu0 0.0
    %1155 = vmatpush1.msra.mxu0 0.0
    %1156 = vmatprep.subr.mxu0 0.0
    %1157 = vmatpush1.msra.mxu0 0.0
    %1158 = vmatprep.subr.mxu0 0.0
    %1159 = vmatpush1.msra.mxu0 0.0
    %1160 = vmatprep.subr.mxu0 0.0
    %1161 = vmatpush1.msra.mxu0 0.0
    %1162 = vmatprep.subr.mxu0 0.0
    %1163 = vmatpush1.msra.mxu0 0.0
    %1164 = vmatprep.subr.mxu0 0.0
    %1165 = vmatpush1.msra.mxu0 0.0
    %1166 = vmatprep.subr.mxu0 0.0
    %1167 = vmatpush1.msra.mxu0 0.0
    %1168 = vmatprep.subr.mxu0 0.0
    %1169 = vmatpush1.msra.mxu0 0.0
    %1170 = vmatprep.subr.mxu0 0.0
    %1171 = vmatpush1.msra.mxu0 0.0
    %1172 = vmatprep.subr.mxu0 0.0
    %1173 = vmatpush1.msra.mxu0 0.0
    %1174 = vmatprep.subr.mxu0 0.0
    %1175 = vmatpush1.msra.mxu0 0.0
    %1176 = vmatprep.subr.mxu0 0.0
    %1177 = vmatpush1.msra.mxu0 0.0
    %1178 = vmatprep.subr.mxu0 0.0
    %1179 = vmatpush1.msra.mxu0 0.0
    %1180 = vmatprep.subr.mxu0 0.0
    %1181 = vmatpush1.msra.mxu0 0.0
    %1182 = vmatprep.subr.mxu0 0.0
    %1183 = vmatpush1.msra.mxu0 0.0
    %1184 = vmatprep.subr.mxu0 0.0
    %1185 = vmatpush1.msra.mxu0 0.0
    %1186 = vmatprep.subr.mxu0 0.0
    %1187 = vmatpush1.msra.mxu0 0.0
    %1188 = vmatprep.subr.mxu0 0.0
    %1189 = vmatpush1.msra.mxu0 0.0
    %1190 = vmatprep.subr.mxu0 0.0
    %1191 = vmatpush1.msra.mxu0 0.0
    %1192 = vmatprep.mubr.f32.mxu0 0.0
    %1193 = vmatmul.mubr.f32.gmra.mrb[0].mxu0 %v1123
    %v1194 = vpop.f32.mrb[0].mxu0
    %v1195 = vadd.f32 %v684, %v1194
    %v1196 = vpop.f32.mrb[0].mxu0
    %1197 = vmatprep.mubr.f32.mxu0 0.0
    %1198 = vmatmul.mubr.f32.gmra.mrb[0].mxu0 %v1126
    %v1199 = vpop.f32.mrb[0].mxu0
    %v1200 = vadd.f32 %v685, %v1199
    %v1201 = vpop.f32.mrb[0].mxu0
    %1202 = vdwg.mxu0
    %v1203 = vsel %vm71, %v1195, 0.0
    %1204 = vadd.xlane.f32.xlu0 %v1203
    %v1205 = vpop.xlane.xlu0 %1204
    %v1206 = vsel %vm71, %v1200, 0.0
    %1207 = vadd.xlane.f32.xlu0 %v1206
    %v1208 = vpop.xlane.xlu0 %1207
    %v1209 = vmul.f32 %v1205, %v585
    %v1210 = vmul.f32 %v1208, %v585
    %v1211 = vmul.f32 %v1195, %v1195
    %v1212 = vmul.f32 %v1200, %v1200
    %v1213 = vsel %vm71, %v1211, 0.0
    %1214 = vadd.xlane.f32.xlu0 %v1213
    %v1215 = vpop.xlane.xlu0 %1214
    %v1216 = vsel %vm71, %v1212, 0.0
    %1217 = vadd.xlane.f32.xlu0 %v1216
    %v1218 = vpop.xlane.xlu0 %1217
    %v1219 = vmul.f32 %v1215, %v585
    %v1220 = vmul.f32 %v1218, %v585
    %v1221 = vmul.f32 %v1209, %v1209
    %v1222 = vmul.f32 %v1210, %v1210
    %v1223 = vsub.f32 %v1219, %v1221
    %v1224 = vsub.f32 %v1220, %v1222
    %v1225 = vsub.f32 %v1195, %v1209
    %v1226 = vsub.f32 %v1200, %v1210
    %v1227 = vadd.f32 %v1223, 1e-05
    %v1228 = vadd.f32 %v1224, 1e-05
    %v1229 = vrsqrt.pop %v1227
    %v1230 = vrsqrt.pop %v1228
    %v1231 = vmul.f32 %v1225, %v1229
    %v1232 = vmul.f32 %v1226, %v1230
    %v1233 = vlaneseq
    %v1234 = vshrl.u32 %v1233, 7
    %v1235 = vsub.s32 0, %v1234
    %v1236 = vrot.slane %v693, %v1235
    %v1237 = vmul.f32 %v1231, %v1236
    %v1238 = vmul.f32 %v1232, %v1236
    %v1239 = vlaneseq
    %v1240 = vshrl.u32 %v1239, 7
    %v1241 = vsub.s32 0, %v1240
    %v1242 = vrot.slane %v694, %v1241
    %v1243 = vadd.f32 %v1237, %v1242
    %v1244 = vadd.f32 %v1238, %v1242
    %v1245 = vlaneseq
    %v1246 = vshrl.u32 %v1245, 7
    %v1247 = vsub.s32 0, %v1246
    %v1248 = vrot.slane %v691, %v1247
    %v1249 = vmul.f32 %v1243, %v1248
    %v1250 = vmul.f32 %v1244, %v1248
    %v1251 = vsel %vm71, %v1249, 0.0
    %1252 = vadd.xlane.f32.xlu0 %v1251
    %v1253 = vpop.xlane.xlu0 %1252
    %v1254 = vsel %vm71, %v1250, 0.0
    %1255 = vadd.xlane.f32.xlu0 %v1254
    %v1256 = vpop.xlane.xlu0 %1255
    %v1257 = vmax.f32 %v1253, 0.0
    %v1258 = vmax.f32 %v1256, 0.0
    %v1259 = vlaneseq
    %v1260 = vshrl.u32 %v1259, 7
    %v1261 = vsub.s32 0, %v1260
    %v1262 = vrot.slane %v692, %v1261
    %v1263 = vmul.f32 %v1257, %v1262
    %v1264 = vmul.f32 %v1258, %v1262
    %v1265 = vadd.f32 %v1263, %v1243
    %v1266 = vadd.f32 %v1264, %v1244
    %v1267 = vsel %vm71, %v1265, 0.0
    %1268 = vadd.xlane.f32.xlu0 %v1267
    %v1269 = vpop.xlane.xlu0 %1268
    %v1270 = vsel %vm71, %v1266, 0.0
    %1271 = vadd.xlane.f32.xlu0 %v1270
    %v1272 = vpop.xlane.xlu0 %1271
    %v1273 = vmul.f32 %v1269, %v585
    %v1274 = vmul.f32 %v1272, %v585
    %v1275 = vmul.f32 %v1265, %v1265
    %v1276 = vmul.f32 %v1266, %v1266
    %v1277 = vsel %vm71, %v1275, 0.0
    %1278 = vadd.xlane.f32.xlu0 %v1277
    %v1279 = vpop.xlane.xlu0 %1278
    %v1280 = vsel %vm71, %v1276, 0.0
    %1281 = vadd.xlane.f32.xlu0 %v1280
    %v1282 = vpop.xlane.xlu0 %1281
    %v1283 = vmul.f32 %v1279, %v585
    %v1284 = vmul.f32 %v1282, %v585
    %v1285 = vmul.f32 %v1273, %v1273
    %v1286 = vmul.f32 %v1274, %v1274
    %v1287 = vsub.f32 %v1283, %v1285
    %v1288 = vsub.f32 %v1284, %v1286
    %v1289 = vsub.f32 %v1265, %v1273
    %v1290 = vsub.f32 %v1266, %v1274
    %v1291 = vadd.f32 %v1287, 1e-05
    %v1292 = vadd.f32 %v1288, 1e-05
    %v1293 = vrsqrt.pop %v1291
    %v1294 = vrsqrt.pop %v1292
    %v1295 = vmul.f32 %v1289, %v1293
    %v1296 = vmul.f32 %v1290, %v1294
    %v1297 = vlaneseq
    %v1298 = vshrl.u32 %v1297, 7
    %v1299 = vsub.s32 0, %v1298
    %v1300 = vrot.slane %v695, %v1299
    %v1301 = vmul.f32 %v1295, %v1300
    %v1302 = vmul.f32 %v1296, %v1300
    %v1303 = vlaneseq
    %v1304 = vshrl.u32 %v1303, 7
    %v1305 = vsub.s32 0, %v1304
    %v1306 = vrot.slane %v696, %v1305
    %v1307 = vadd.f32 %v1301, %v1306
    %v1308 = vadd.f32 %v1302, %v1306
    %v1311 = vrot.slane %v1308, 7
    %vm1312 = vcmask 1041409
    %v1313 = vsel %vm1312, %v1311, %v1307
    %v1315 = vrot.slane %v1307, 1
    %v1316 = vsel %vm1312, %v1308, %v1315
    %1317 = vrot.lane.b32.xlu0 %v1316, 32
    %v1318 = vpop.permute.xlu0 %1317
    %v1320 = vrot.slane %v1307, 2
    %v1321 = vrot.slane %v1308, 1
    %v1322 = vsel %vm1312, %v1321, %v1320
    %1323 = vrot.lane.b32.xlu0 %v1322, 64
    %v1324 = vpop.permute.xlu0 %1323
    %v1326 = vrot.slane %v1307, 3
    %v1327 = vrot.slane %v1308, 2
    %v1328 = vsel %vm1312, %v1327, %v1326
    %1329 = vrot.lane.b32.xlu0 %v1328, 96
    %v1330 = vpop.permute.xlu0 %1329
    %v1332 = vrot.slane %v1307, 4
    %v1333 = vrot.slane %v1308, 3
    %v1334 = vsel %vm1312, %v1333, %v1332
    %v1336 = vrot.slane %v1307, 5
    %v1337 = vrot.slane %v1308, 4
    %v1338 = vsel %vm1312, %v1337, %v1336
    %1339 = vrot.lane.b32.xlu0 %v1338, 32
    %v1340 = vpop.permute.xlu0 %1339
    %v1342 = vrot.slane %v1307, 6
    %v1343 = vrot.slane %v1308, 5
    %v1344 = vsel %vm1312, %v1343, %v1342
    %1345 = vrot.lane.b32.xlu0 %v1344, 64
    %v1346 = vpop.permute.xlu0 %1345
    %v1348 = vrot.slane %v1307, 7
    %v1349 = vrot.slane %v1308, 6
    %v1350 = vsel %vm1312, %v1349, %v1348
    %1351 = vrot.lane.b32.xlu0 %v1350, 96
    %v1352 = vpop.permute.xlu0 %1351
    %v1354 = vsel %vm71, %v1313, %v1318
    %vm1355 = vcmask 523264
    %v1356 = vsel %vm1355, %v1354, %v1324
    %vm1357 = vcmask 785408
    %v1358 = vsel %vm1357, %v1356, %v1330
    %v1359 = vsel %vm71, %v1334, %v1340
    %v1360 = vsel %vm1355, %v1359, %v1346
    %v1361 = vsel %vm1357, %v1360, %v1352
    %v1364 = vcombine.low %v1358, %v1361
    %v1366 = vunpack.c.l.s4 1983009808
    %v1367 = vunpack.c.0.s8 %v1366
    %v1368 = vlaneseq
    %v1369 = vshrl.u32 %v1368, 7
    %v1370 = vsub.s32 %v1367, %v1369
    %v1371 = vrot.slane %v1364, %v1370
    %1373 = vst [vmem:[#allocation8] sm:$0xf] %v1371
    // Predicated region
    $region26: #{tpu_custom_call.1} parent=1 // pred_check
      _
    $region27: #{tpu_custom_call.1} parent=1 // pred_check_branch
      %1375 = sbr.rel (0) target = $region29
    $region28: #{tpu_custom_call.1} parent=1 // pred_region
      %s1377 = ssub.s32 64, 64
      %1378 = vsyncadd [#allocation4], %s1377
      %s1380 = sshll.u32 [#allocation8], 4
      %s1381 = int_to_ptr.vmem [resolvable:$true] %s1380
      %1383 = dma.vmem_to_hbm [thread:$0]  %s1381, 64, %s3, [#allocation4]
    $region29: #{tpu_custom_call.1} parent=1 // pred_fallthru
      _
    // Predicated region
    $region30: #{tpu_custom_call.1} parent=1 // pred_check
      _
    $region31: #{tpu_custom_call.1} parent=1 // pred_check_branch
      %1385 = sbr.rel (0) target = $region33
    $region32: #{tpu_custom_call.1} parent=1 // pred_region
      %1386 = dma.done [#allocation4], 64
    $region33: #{tpu_custom_call.1} parent=1 // pred_fallthru
      _
    %1387 = vsyncpa [#allocation3], 1
    %1388 = vsyncpa [#allocation6], 1
    %1389 = vsyncpa [#allocation4], 1

</llo_original>
